<compile_context>
chip_gen: v7x
topology: tpu7x:2x2x1
jax: 0.10.0
libtpu: 0.0.40
codegen_flags: <defaults>
</compile_context>

<pallas_src>
import functools

import jax
import jax.numpy as jnp
from jax.experimental import pallas as pl
from jax.experimental.pallas import tpu as pltpu


# ---------------------------------------------------------------------------
# Per-generation sizing (v5e/v6e: 128 MiB VMEM, v7x: 64 MiB).
# ---------------------------------------------------------------------------
@functools.lru_cache(maxsize=None)
def _hw_config():
    try:
        cap = int(pltpu.get_tpu_info().vmem_capacity_bytes)
    except Exception:
        cap = 128 * 1024 * 1024
    big = cap >= 100 * 1024 * 1024
    return {
        "vmem_limit": (64 if big else 32) * 1024 * 1024,
        "flash_tile": 512 if big else 256,   # TQ / TK target on the flash path
        "weights_tq": 256 if big else 128,   # TQ target on the weights path
    }


def _pick_tile(n, target, floor=8):
    """Largest power-of-two tile in [floor, target] dividing n, else the full extent."""
    t = min(target, n)
    while t >= floor and n % t:
        t //= 2
    return t if (t >= floor and n % t == 0) else n


# ---------------------------------------------------------------------------
# Kernel 1 (default): fused projection + flash attention with online softmax.
# grid = (B, q_tiles, kv_tiles); no N x N tensor ever touches HBM or VMEM whole.
# ---------------------------------------------------------------------------
def _flash_fused_kernel(*refs, has_mask, mask_rank, tbl_has_batch, scale, cd):
    if has_mask:
        (tbl_ref, xq_ref, xk_ref, xv_ref,
         wq_ref, bq_ref, wk_ref, bk_ref, wv_ref, bv_ref,
         mask_ref, y_ref, q_sc, m_sc, l_sc, acc_sc) = refs
    else:
        (xq_ref, xk_ref, xv_ref,
         wq_ref, bq_ref, wk_ref, bk_ref, wv_ref, bv_ref,
         y_ref, q_sc, m_sc, l_sc, acc_sc) = refs
        tbl_ref = mask_ref = None

    ki = pl.program_id(2)
    nk = pl.num_programs(2)

    @pl.when(ki == 0)
    def _init():
        # Fused Q projection; fold 1/sqrt(dim_q) in here (once per q tile,
        # never in the kv inner loop).  bf16 MXU operands, f32 accumulation.
        q = jnp.dot(xq_ref[0].astype(cd), wq_ref[...],
                    preferred_element_type=jnp.float32)
        q_sc[...] = (q + bq_ref[...]) * scale
        m_sc[...] = jnp.full_like(m_sc, -jnp.inf)
        l_sc[...] = jnp.zeros_like(l_sc)
        acc_sc[...] = jnp.zeros_like(acc_sc)

    def _step():
        # Fused K/V projection for this kv tile (stays in VMEM / registers).
        k = jnp.dot(xk_ref[0].astype(cd), wk_ref[...],
                    preferred_element_type=jnp.float32) + bk_ref[...]
        v = jnp.dot(xv_ref[0].astype(cd), wv_ref[...],
                    preferred_element_type=jnp.float32) + bv_ref[...]
        # Contract K's last dim directly (no explicit transpose through the XLU).
        s = jax.lax.dot_general(q_sc[...].astype(cd), k.astype(cd),
                                (((1,), (1,)), ((), ())),
                                preferred_element_type=jnp.float32)
        if has_mask:
            m = mask_ref[...] if mask_rank == 2 else mask_ref[0]
            s = jnp.where(m != 0, -1e9, s)          # torch.masked_fill semantics
        m_prev = m_sc[...]
        m_new = jnp.maximum(m_prev, jnp.max(s, axis=-1, keepdims=True))
        alpha = jnp.exp(m_prev - m_new)
        p = jnp.exp(s - m_new)
        l_sc[...] = alpha * l_sc[...] + jnp.sum(p, axis=-1, keepdims=True)
        acc_sc[...] = alpha * acc_sc[...] + jnp.dot(
            p.astype(cd), v.astype(cd), preferred_element_type=jnp.float32)
        m_sc[...] = m_new

    if has_mask:
        # Skip kv tiles whose every entry is masked (SMEM tile table, scalar read).
        b = pl.program_id(0)
        qi = pl.program_id(1)
        nq = pl.num_programs(1)
        flat = qi * nk + ki
        if tbl_has_batch:
            flat = flat + b * nq * nk
        pl.when(tbl_ref[flat] > 0)(_step)
    else:
        _step()

    @pl.when(ki == nk - 1)
    def _finalize():
        y_ref[0] = (acc_sc[...] * pl.reciprocal(l_sc[...], approx=True)
                    ).astype(y_ref.dtype)


# ---------------------------------------------------------------------------
# Kernel 2 (compatibility): fused projection + full-row softmax, also emits the
# softmax weights (the PyTorch module stores self.weights_softmax).
# grid = (B, q_tiles).
# ---------------------------------------------------------------------------
def _attn_weights_kernel(*refs, has_mask, mask_rank, scale, cd):
    if has_mask:
        (xq_ref, xk_ref, xv_ref,
         wq_ref, bq_ref, wk_ref, bk_ref, wv_ref, bv_ref,
         mask_ref, y_ref, w_ref) = refs
    else:
        (xq_ref, xk_ref, xv_ref,
         wq_ref, bq_ref, wk_ref, bk_ref, wv_ref, bv_ref,
         y_ref, w_ref) = refs
        mask_ref = None

    q = (jnp.dot(xq_ref[0].astype(cd), wq_ref[...],
                 preferred_element_type=jnp.float32) + bq_ref[...]) * scale
    k = jnp.dot(xk_ref[0].astype(cd), wk_ref[...],
                preferred_element_type=jnp.float32) + bk_ref[...]
    v = jnp.dot(xv_ref[0].astype(cd), wv_ref[...],
                preferred_element_type=jnp.float32) + bv_ref[...]

    s = jax.lax.dot_general(q.astype(cd), k.astype(cd),
                            (((1,), (1,)), ((), ())),
                            preferred_element_type=jnp.float32)
    if has_mask:
        m = mask_ref[...] if mask_rank == 2 else mask_ref[0]
        s = jnp.where(m != 0, -1e9, s)

    s = s - jnp.max(s, axis=-1, keepdims=True)
    p = jnp.exp(s)
    # Exact reciprocal: the weights are an exposed output and should sum to ~1.
    w = p * (1.0 / jnp.sum(p, axis=-1, keepdims=True))

    y_ref[0] = jnp.dot(w.astype(cd), v.astype(cd),
                       preferred_element_type=jnp.float32).astype(y_ref.dtype)
    w_ref[0] = w.astype(w_ref.dtype)


# ---------------------------------------------------------------------------
# Python wrapper.
# ---------------------------------------------------------------------------
def self_attention_pallas(query, key, value, params, mask=None,
                          return_weights=False,
                          compute_dtype=jnp.bfloat16,
                          weights_dtype=jnp.float32):
    """Forward of the PyTorch SelfAttention module.

    query/key/value: (B, N, dim_in) float32.
    mask: optional (N, N) or (B, N, N); nonzero => filled with -1e9 (masked_fill).
    return_weights=False -> y only (flash path, default; no N^2 HBM traffic).
    return_weights=True  -> (y, weights_softmax) (module stores the weights).
    compute_dtype: MXU operand dtype (bf16 default, f32 accumulation kept either way).
    """
    wq, bq, wk, bk, wv, bv = params
    B, N, dim_in = query.shape
    dim_q = wq.shape[1]
    dim_v = wv.shape[1]
    scale = 1.0 / (dim_q ** 0.5)
    cfg = _hw_config()

    # Parameters go to the MXU operand dtype once here; biases stay f32 (added to
    # the f32 accumulator inside the kernels).
    wq_c = wq.astype(compute_dtype)
    wk_c = wk.astype(compute_dtype)
    wv_c = wv.astype(compute_dtype)
    bq2 = bq.reshape(1, dim_q).astype(jnp.float32)
    bk2 = bk.reshape(1, dim_q).astype(jnp.float32)
    bv2 = bv.reshape(1, dim_v).astype(jnp.float32)

    has_mask = mask is not None
    mask_rank = 0
    mask_i8 = None
    if has_mask:
        mask_rank = mask.ndim
        if mask_rank not in (2, 3):
            raise ValueError("mask must have shape (N, N) or (B, N, N)")
        # Keep the mask at its native rank (no B-fold broadcast copies); int8 in VMEM.
        mask_i8 = mask.astype(jnp.int8)

    # ------------------------------------------------------------------
    # Compatibility path: y + softmax weights.
    # ------------------------------------------------------------------
    if return_weights:
        TQ = _pick_tile(N, cfg["weights_tq"], floor=8)
        nq = N // TQ

        im_q = lambda b, qi: (b, qi, 0)
        im_full = lambda b, qi: (b, 0, 0)
        im_c = lambda b, qi: (0, 0)
        in_specs = [
            pl.BlockSpec((1, TQ, dim_in), im_q),
            pl.BlockSpec((1, N, dim_in), im_full),
            pl.BlockSpec((1, N, dim_in), im_full),
            pl.BlockSpec((dim_in, dim_q), im_c), pl.BlockSpec((1, dim_q), im_c),
            pl.BlockSpec((dim_in, dim_q), im_c), pl.BlockSpec((1, dim_q), im_c),
            pl.BlockSpec((dim_in, dim_v), im_c), pl.BlockSpec((1, dim_v), im_c),
        ]
        args = [query, key, value, wq_c, bq2, wk_c, bk2, wv_c, bv2]
        if has_mask:
            if mask_rank == 2:
                in_specs.append(pl.BlockSpec((TQ, N), lambda b, qi: (qi, 0)))
            else:
                in_specs.append(pl.BlockSpec((1, TQ, N), lambda b, qi: (b, qi, 0)))
            args.append(mask_i8)

        kernel = functools.partial(_attn_weights_kernel, has_mask=has_mask,
                                   mask_rank=mask_rank, scale=scale,
                                   cd=compute_dtype)
        y, w = pl.pallas_call(
            kernel,
            out_shape=(jax.ShapeDtypeStruct((B, N, dim_v), jnp.float32),
                       jax.ShapeDtypeStruct((B, N, N), weights_dtype)),
            grid_spec=pltpu.PrefetchScalarGridSpec(
                num_scalar_prefetch=0,
                grid=(B, nq),
                in_specs=in_specs,
                out_specs=[pl.BlockSpec((1, TQ, dim_v), im_q),
                           pl.BlockSpec((1, TQ, N), im_q)],
            ),
            compiler_params=pltpu.CompilerParams(
                dimension_semantics=("parallel", "parallel"),
                vmem_limit_bytes=cfg["vmem_limit"],
            ),
        )(*args)
        return y, w

    # ------------------------------------------------------------------
    # Default flash path: y only.
    # ------------------------------------------------------------------
    TQ = _pick_tile(N, cfg["flash_tile"], floor=8)
    TK = _pick_tile(N, cfg["flash_tile"], floor=128)   # lane-dim tiles >=128 or full
    # v7x megacore: make sure the parallel axes expose at least 2 programs.
    while B * (N // TQ) < 2 and TQ >= 16 and N % (TQ // 2) == 0:
        TQ //= 2
    nq = N // TQ
    nk = N // TK

    if has_mask:
        im_q = lambda b, qi, ki, tbl: (b, qi, 0)
        im_kv = lambda b, qi, ki, tbl: (b, ki, 0)
        im_c = lambda b, qi, ki, tbl: (0, 0)
    else:
        im_q = lambda b, qi, ki: (b, qi, 0)
        im_kv = lambda b, qi, ki: (b, ki, 0)
        im_c = lambda b, qi, ki: (0, 0)

    in_specs = [
        pl.BlockSpec((1, TQ, dim_in), im_q),
        pl.BlockSpec((1, TK, dim_in), im_kv),
        pl.BlockSpec((1, TK, dim_in), im_kv),
        pl.BlockSpec((dim_in, dim_q), im_c), pl.BlockSpec((1, dim_q), im_c),
        pl.BlockSpec((dim_in, dim_q), im_c), pl.BlockSpec((1, dim_q), im_c),
        pl.BlockSpec((dim_in, dim_v), im_c), pl.BlockSpec((1, dim_v), im_c),
    ]
    args = [query, key, value, wq_c, bq2, wk_c, bk2, wv_c, bv2]

    tbl_has_batch = False
    prefetch_args = []
    num_prefetch = 0
    if has_mask:
        if mask_rank == 2:
            in_specs.append(pl.BlockSpec((TQ, TK), lambda b, qi, ki, tbl: (qi, ki)))
        else:
            tbl_has_batch = True
            in_specs.append(
                pl.BlockSpec((1, TQ, TK), lambda b, qi, ki, tbl: (b, qi, ki)))
        args.append(mask_i8)

        # Tile-level "any unmasked element" table (scalar-prefetched to SMEM).
        # ki == 0 is forced on so every query row processes at least one kv tile
        # (keeps l > 0; degenerate fully-masked rows stay finite).
        keep = (mask_i8 == 0)
        if mask_rank == 2:
            keep_t = keep.reshape(nq, TQ, nk, TK).any(axis=(1, 3))
            keep_t = keep_t.at[:, 0].set(True)
        else:
            keep_t = keep.reshape(B, nq, TQ, nk, TK).any(axis=(2, 4))
            keep_t = keep_t.at[:, :, 0].set(True)
        prefetch_args = [keep_t.astype(jnp.int32).reshape(-1)]
        num_prefetch = 1

    kernel = functools.partial(_flash_fused_kernel, has_mask=has_mask,
                               mask_rank=mask_rank, tbl_has_batch=tbl_has_batch,
                               scale=scale, cd=compute_dtype)
    y = pl.pallas_call(
        kernel,
        out_shape=jax.ShapeDtypeStruct((B, N, dim_v), jnp.float32),
        grid_spec=pltpu.PrefetchScalarGridSpec(
            num_scalar_prefetch=num_prefetch,
            grid=(B, nq, nk),
            in_specs=in_specs,
            out_specs=pl.BlockSpec((1, TQ, dim_v), im_q),
            scratch_shapes=[
                pltpu.VMEM((TQ, dim_q), jnp.float32),   # projected + scaled Q tile
                pltpu.VMEM((TQ, 1), jnp.float32),       # running max m
                pltpu.VMEM((TQ, 1), jnp.float32),       # running denom l
                pltpu.VMEM((TQ, dim_v), jnp.float32),   # output accumulator
            ],
        ),
        compiler_params=pltpu.CompilerParams(
            dimension_semantics=("parallel", "parallel", "arbitrary"),
            vmem_limit_bytes=cfg["vmem_limit"],
        ),
    )(*prefetch_args, *args)
    return y


def init_self_attention_params(key, dim_in, dim_q, dim_v):
    """Matches the PyTorch module: uniform(-c, c), c = sqrt(6/(dim_in+dim_q)),
    zero biases.  Weights stored transposed as (dim_in, dim_out)."""
    c = (6.0 / (dim_in + dim_q)) ** 0.5
    k1, k2, k3 = jax.random.split(key, 3)
    wq = jax.random.uniform(k1, (dim_in, dim_q), jnp.float32, -c, c)
    wk = jax.random.uniform(k2, (dim_in, dim_q), jnp.float32, -c, c)
    wv = jax.random.uniform(k3, (dim_in, dim_v), jnp.float32, -c, c)
    bq = jnp.zeros((dim_q,), jnp.float32)
    bk = jnp.zeros((dim_q,), jnp.float32)
    bv = jnp.zeros((dim_v,), jnp.float32)
    return (wq, bq, wk, bk, wv, bv)


def _reference(query, key, value, params, mask=None):
    """Plain-JAX f32 reference of the PyTorch forward."""
    wq, bq, wk, bk, wv, bv = params
    Q = query @ wq + bq
    K = key @ wk + bk
    V = value @ wv + bv
    M = Q.shape[-1]
    s = jnp.einsum("bnd,bmd->bnm", Q, K) / (M ** 0.5)
    if mask is not None:
        s = jnp.where(mask, -1e9, s)
    w = jax.nn.softmax(s, axis=-1)
    return jnp.einsum("bnm,bmd->bnd", w, V), w


if __name__ == "__main__":
    # Small shapes consistent with the module (emb_dim = 4).
    B, N, dim_in, dim_q, dim_v = 2, 8, 4, 4, 4

    root = jax.random.PRNGKey(0)
    kp, kq, kk, kv = jax.random.split(root, 4)

    params = init_self_attention_params(kp, dim_in, dim_q, dim_v)
    query = jax.random.normal(kq, (B, N, dim_in), jnp.float32)
    key_x = jax.random.normal(kk, (B, N, dim_in), jnp.float32)
    value = jax.random.normal(kv, (B, N, dim_in), jnp.float32)

    # Causal mask (True = masked out), as torch.masked_fill expects.
    causal = jnp.triu(jnp.ones((N, N), dtype=bool), k=1)

    y_ref_m, w_ref_m = _reference(query, key_x, value, params, mask=causal)
    y_ref_nm, _ = _reference(query, key_x, value, params, mask=None)

    TOL = dict(atol=3e-2, rtol=3e-2)   # bf16 MXU operands, f32 accumulation

    # 1) default flash path with a shared 2-D mask (no per-batch mask copies).
    y1 = jax.block_until_ready(
        self_attention_pallas(query, key_x, value, params, mask=causal))
    assert jnp.allclose(y1, y_ref_m, **TOL), "flash (2-D mask) mismatch"

    # 2) flash path with a per-batch 3-D mask (exercises the batched mask/table path).
    mask3 = jnp.broadcast_to(causal, (B, N, N))
    y2 = jax.block_until_ready(
        self_attention_pallas(query, key_x, value, params, mask=mask3))
    assert jnp.allclose(y2, y_ref_m, **TOL), "flash (3-D mask) mismatch"

    # 3) flash path, no mask (no mask DMA, no skip table).
    y3 = jax.block_until_ready(
        self_attention_pallas(query, key_x, value, params, mask=None))
    assert jnp.allclose(y3, y_ref_nm, **TOL), "flash (no mask) mismatch"

    # 4) compatibility path: y + softmax weights (module stores self.weights_softmax).
    y4, w4 = self_attention_pallas(query, key_x, value, params, mask=causal,
                                   return_weights=True)
    y4 = jax.block_until_ready(y4)
    w4 = jax.block_until_ready(w4)
    assert jnp.allclose(y4, y_ref_m, **TOL), "weights-path y mismatch"
    assert jnp.allclose(w4, w_ref_m, **TOL), "weights-path w mismatch"

    # 5) strict-numerics check: f32 MXU operands match the f32 reference tightly.
    y5 = jax.block_until_ready(
        self_attention_pallas(query, key_x, value, params, mask=causal,
                              compute_dtype=jnp.float32))
    assert jnp.allclose(y5, y_ref_m, atol=2e-3, rtol=2e-3), "f32 flash mismatch"

    print("KERNEL_OK")
</pallas_src>

<mosaic_0001>
module attributes {stable_mosaic.version = 11 : i64} {
  func.func @_flash_fused_kernel(%arg0: i32, %arg1: i32, %arg2: i32, %arg3: memref<1xi32, #tpu.memory_space<smem>>, %arg4: memref<1x8x4xf32, #tpu.memory_space<vmem>>, %arg5: memref<1x8x4xf32, #tpu.memory_space<vmem>>, %arg6: memref<1x8x4xf32, #tpu.memory_space<vmem>>, %arg7: memref<4x4xbf16, #tpu.memory_space<vmem>>, %arg8: memref<1x4xf32, #tpu.memory_space<vmem>>, %arg9: memref<4x4xbf16, #tpu.memory_space<vmem>>, %arg10: memref<1x4xf32, #tpu.memory_space<vmem>>, %arg11: memref<4x4xbf16, #tpu.memory_space<vmem>>, %arg12: memref<1x4xf32, #tpu.memory_space<vmem>>, %arg13: memref<8x8xi8, #tpu.memory_space<vmem>>, %arg14: memref<1x8x4xf32, #tpu.memory_space<vmem>>, %arg15: memref<8x4xf32, #tpu.memory_space<vmem>>, %arg16: memref<8x1xf32, #tpu.memory_space<vmem>>, %arg17: memref<8x1xf32, #tpu.memory_space<vmem>>, %arg18: memref<8x4xf32, #tpu.memory_space<vmem>>) attributes {dimension_semantics = [#tpu.dimension_semantics<parallel>, #tpu.dimension_semantics<parallel>, #tpu.dimension_semantics<arbitrary>], iteration_bounds = array<i64: 2, 1, 1>, scalar_prefetch = 1 : i64, scratch_operands = 4 : i64, tpu.core_type = #tpu.core_type<tc>, window_params = [{transform_indices = @transform_0, window_bounds = array<i64: 1, 8, 4>}, {transform_indices = @transform_1, window_bounds = array<i64: 1, 8, 4>}, {transform_indices = @transform_2, window_bounds = array<i64: 1, 8, 4>}, {pipeline_mode = #tpu.pipeline_mode<synchronous>, transform_indices = @transform_3, window_bounds = array<i64: 4, 4>}, {pipeline_mode = #tpu.pipeline_mode<synchronous>, transform_indices = @transform_4, window_bounds = array<i64: 1, 4>}, {pipeline_mode = #tpu.pipeline_mode<synchronous>, transform_indices = @transform_5, window_bounds = array<i64: 4, 4>}, {pipeline_mode = #tpu.pipeline_mode<synchronous>, transform_indices = @transform_6, window_bounds = array<i64: 1, 4>}, {pipeline_mode = #tpu.pipeline_mode<synchronous>, transform_indices = @transform_7, window_bounds = array<i64: 4, 4>}, {pipeline_mode = #tpu.pipeline_mode<synchronous>, transform_indices = @transform_8, window_bounds = array<i64: 1, 4>}, {transform_indices = @transform_9, window_bounds = array<i64: 8, 8>}, {transform_indices = @transform_10, window_bounds = array<i64: 1, 8, 4>}]} {
    %c0_i32 = arith.constant 0 : i32
    %0 = arith.cmpi eq, %arg2, %c0_i32 : i32
    %1 = arith.extui %0 : i1 to i32
    %c0_i32_0 = arith.constant 0 : i32
    %2 = arith.cmpi ne, %1, %c0_i32_0 : i32
    scf.if %2 {
      %c0 = arith.constant 0 : index
      %c0_5 = arith.constant 0 : index
      %c0_6 = arith.constant 0 : index
      %13 = vector.load %arg4[%c0, %c0_5, %c0_6] : memref<1x8x4xf32, #tpu.memory_space<vmem>>, vector<1x8x4xf32>
      %14 = vector.shape_cast %13 : vector<1x8x4xf32> to vector<8x4xf32>
      %15 = arith.truncf %14 : vector<8x4xf32> to vector<8x4xbf16>
      %c0_7 = arith.constant 0 : index
      %c0_8 = arith.constant 0 : index
      %16 = vector.load %arg7[%c0_7, %c0_8] : memref<4x4xbf16, #tpu.memory_space<vmem>>, vector<4x4xbf16>
      %cst = arith.constant dense<0.000000e+00> : vector<8x4xf32>
      %17 = tpu.matmul %15, %16, %cst {dimension_numbers = #tpu.dot_dimension_numbers<[1], [0], [0], [1], [0, 0, 1, 1], [], []>} : vector<8x4xbf16>, vector<4x4xbf16>, vector<8x4xf32> -> vector<8x4xf32>
      %c0_9 = arith.constant 0 : index
      %c0_10 = arith.constant 0 : index
      %18 = vector.load %arg8[%c0_9, %c0_10] : memref<1x4xf32, #tpu.memory_space<vmem>>, vector<1x4xf32>
      %19 = vector.broadcast %18 : vector<1x4xf32> to vector<8x4xf32>
      %20 = arith.addf %17, %19 : vector<8x4xf32>
      %cst_11 = arith.constant 5.000000e-01 : f32
      %21 = vector.broadcast %cst_11 : f32 to vector<8x4xf32>
      %22 = arith.mulf %20, %21 : vector<8x4xf32>
      %c0_12 = arith.constant 0 : index
      %c0_13 = arith.constant 0 : index
      %23 = vector.load %arg15[%c0_12, %c0_13] : memref<8x4xf32, #tpu.memory_space<vmem>>, vector<8x4xf32>
      tpu.vector_store %arg15[%c0_12, %c0_13], %22 {strides = array<i32>} : memref<8x4xf32, #tpu.memory_space<vmem>>, vector<8x4xf32>,
      %cst_14 = arith.constant 0xFF800000 : f32
      %24 = vector.broadcast %cst_14 : f32 to vector<8x1xf32>
      %c0_15 = arith.constant 0 : index
      %c0_16 = arith.constant 0 : index
      %25 = vector.load %arg16[%c0_15, %c0_16] : memref<8x1xf32, #tpu.memory_space<vmem>>, vector<8x1xf32>
      tpu.vector_store %arg16[%c0_15, %c0_16], %24 {strides = array<i32>} : memref<8x1xf32, #tpu.memory_space<vmem>>, vector<8x1xf32>,
      %cst_17 = arith.constant 0.000000e+00 : f32
      %26 = vector.broadcast %cst_17 : f32 to vector<8x1xf32>
      %c0_18 = arith.constant 0 : index
      %c0_19 = arith.constant 0 : index
      %27 = vector.load %arg17[%c0_18, %c0_19] : memref<8x1xf32, #tpu.memory_space<vmem>>, vector<8x1xf32>
      tpu.vector_store %arg17[%c0_18, %c0_19], %26 {strides = array<i32>} : memref<8x1xf32, #tpu.memory_space<vmem>>, vector<8x1xf32>,
      %cst_20 = arith.constant 0.000000e+00 : f32
      %28 = vector.broadcast %cst_20 : f32 to vector<8x4xf32>
      %c0_21 = arith.constant 0 : index
      %c0_22 = arith.constant 0 : index
      %29 = vector.load %arg18[%c0_21, %c0_22] : memref<8x4xf32, #tpu.memory_space<vmem>>, vector<8x4xf32>
      tpu.vector_store %arg18[%c0_21, %c0_22], %28 {strides = array<i32>} : memref<8x4xf32, #tpu.memory_space<vmem>>, vector<8x4xf32>,
    } else {
    }
    %c1_i32 = arith.constant 1 : i32
    %3 = arith.muli %arg1, %c1_i32 : i32
    %4 = arith.addi %3, %arg2 : i32
    %5 = arith.index_cast %4 : i32 to index
    %6 = memref.load %arg3[%5] : memref<1xi32, #tpu.memory_space<smem>>
    %c0_i32_1 = arith.constant 0 : i32
    %7 = arith.cmpi sgt, %6, %c0_i32_1 : i32
    %8 = arith.extui %7 : i1 to i32
    %c0_i32_2 = arith.constant 0 : i32
    %9 = arith.cmpi ne, %8, %c0_i32_2 : i32
    scf.if %9 {
      %c0 = arith.constant 0 : index
      %c0_5 = arith.constant 0 : index
      %c0_6 = arith.constant 0 : index
      %13 = vector.load %arg5[%c0, %c0_5, %c0_6] : memref<1x8x4xf32, #tpu.memory_space<vmem>>, vector<1x8x4xf32>
      %14 = vector.shape_cast %13 : vector<1x8x4xf32> to vector<8x4xf32>
      %15 = arith.truncf %14 : vector<8x4xf32> to vector<8x4xbf16>
      %c0_7 = arith.constant 0 : index
      %c0_8 = arith.constant 0 : index
      %16 = vector.load %arg9[%c0_7, %c0_8] : memref<4x4xbf16, #tpu.memory_space<vmem>>, vector<4x4xbf16>
      %cst = arith.constant dense<0.000000e+00> : vector<8x4xf32>
      %17 = tpu.matmul %15, %16, %cst {dimension_numbers = #tpu.dot_dimension_numbers<[1], [0], [0], [1], [0, 0, 1, 1], [], []>} : vector<8x4xbf16>, vector<4x4xbf16>, vector<8x4xf32> -> vector<8x4xf32>
      %c0_9 = arith.constant 0 : index
      %c0_10 = arith.constant 0 : index
      %18 = vector.load %arg10[%c0_9, %c0_10] : memref<1x4xf32, #tpu.memory_space<vmem>>, vector<1x4xf32>
      %19 = vector.broadcast %18 : vector<1x4xf32> to vector<8x4xf32>
      %20 = arith.addf %17, %19 : vector<8x4xf32>
      %c0_11 = arith.constant 0 : index
      %c0_12 = arith.constant 0 : index
      %c0_13 = arith.constant 0 : index
      %21 = vector.load %arg6[%c0_11, %c0_12, %c0_13] : memref<1x8x4xf32, #tpu.memory_space<vmem>>, vector<1x8x4xf32>
      %22 = vector.shape_cast %21 : vector<1x8x4xf32> to vector<8x4xf32>
      %23 = arith.truncf %22 : vector<8x4xf32> to vector<8x4xbf16>
      %c0_14 = arith.constant 0 : index
      %c0_15 = arith.constant 0 : index
      %24 = vector.load %arg11[%c0_14, %c0_15] : memref<4x4xbf16, #tpu.memory_space<vmem>>, vector<4x4xbf16>
      %cst_16 = arith.constant dense<0.000000e+00> : vector<8x4xf32>
      %25 = tpu.matmul %23, %24, %cst_16 {dimension_numbers = #tpu.dot_dimension_numbers<[1], [0], [0], [1], [0, 0, 1, 1], [], []>} : vector<8x4xbf16>, vector<4x4xbf16>, vector<8x4xf32> -> vector<8x4xf32>
      %c0_17 = arith.constant 0 : index
      %c0_18 = arith.constant 0 : index
      %26 = vector.load %arg12[%c0_17, %c0_18] : memref<1x4xf32, #tpu.memory_space<vmem>>, vector<1x4xf32>
      %27 = vector.broadcast %26 : vector<1x4xf32> to vector<8x4xf32>
      %28 = arith.addf %25, %27 : vector<8x4xf32>
      %c0_19 = arith.constant 0 : index
      %c0_20 = arith.constant 0 : index
      %29 = vector.load %arg15[%c0_19, %c0_20] : memref<8x4xf32, #tpu.memory_space<vmem>>, vector<8x4xf32>
      %30 = arith.truncf %29 : vector<8x4xf32> to vector<8x4xbf16>
      %31 = arith.truncf %20 : vector<8x4xf32> to vector<8x4xbf16>
      %cst_21 = arith.constant dense<0.000000e+00> : vector<8x8xf32>
      %32 = tpu.matmul %30, %31, %cst_21 {dimension_numbers = #tpu.dot_dimension_numbers<[1], [1], [0], [0], [0, 0, 1, 0], [], []>} : vector<8x4xbf16>, vector<8x4xbf16>, vector<8x8xf32> -> vector<8x8xf32>
      %c0_22 = arith.constant 0 : index
      %c0_23 = arith.constant 0 : index
      %33 = vector.load %arg13[%c0_22, %c0_23] : memref<8x8xi8, #tpu.memory_space<vmem>>, vector<8x8xi8>
      %c0_i8 = arith.constant 0 : i8
      %34 = vector.broadcast %c0_i8 : i8 to vector<8x8xi8>
      %35 = arith.cmpi ne, %33, %34 : vector<8x8xi8>
      %cst_24 = arith.constant -1.000000e+09 : f32
      %36 = vector.broadcast %cst_24 : f32 to vector<8x8xf32>
      %37 = arith.select %35, %36, %32 : vector<8x8xi1>, vector<8x8xf32>
      %c0_25 = arith.constant 0 : index
      %c0_26 = arith.constant 0 : index
      %38 = vector.load %arg16[%c0_25, %c0_26] : memref<8x1xf32, #tpu.memory_space<vmem>>, vector<8x1xf32>
      %cst_27 = arith.constant dense<0xFF800000> : vector<8xf32>
      %39 = vector.multi_reduction <maximumf>, %37, %cst_27 [1] : vector<8x8xf32> to vector<8xf32>
      %40 = vector.shape_cast %39 : vector<8xf32> to vector<8x1xf32>
      %41 = arith.maximumf %38, %40 : vector<8x1xf32>
      %42 = arith.subf %38, %41 : vector<8x1xf32>
      %43 = math.exp %42 : vector<8x1xf32>
      %44 = vector.broadcast %41 : vector<8x1xf32> to vector<8x8xf32>
      %45 = arith.subf %37, %44 : vector<8x8xf32>
      %46 = math.exp %45 : vector<8x8xf32>
      %c0_28 = arith.constant 0 : index
      %c0_29 = arith.constant 0 : index
      %47 = vector.load %arg17[%c0_28, %c0_29] : memref<8x1xf32, #tpu.memory_space<vmem>>, vector<8x1xf32>
      %48 = arith.mulf %43, %47 : vector<8x1xf32>
      %cst_30 = arith.constant dense<0.000000e+00> : vector<8xf32>
      %49 = vector.multi_reduction <add>, %46, %cst_30 [1] : vector<8x8xf32> to vector<8xf32>
      %50 = vector.shape_cast %49 : vector<8xf32> to vector<8x1xf32>
      %51 = arith.addf %48, %50 : vector<8x1xf32>
      %c0_31 = arith.constant 0 : index
      %c0_32 = arith.constant 0 : index
      %52 = vector.load %arg17[%c0_31, %c0_32] : memref<8x1xf32, #tpu.memory_space<vmem>>, vector<8x1xf32>
      tpu.vector_store %arg17[%c0_31, %c0_32], %51 {strides = array<i32>} : memref<8x1xf32, #tpu.memory_space<vmem>>, vector<8x1xf32>,
      %c0_33 = arith.constant 0 : index
      %c0_34 = arith.constant 0 : index
      %53 = vector.load %arg18[%c0_33, %c0_34] : memref<8x4xf32, #tpu.memory_space<vmem>>, vector<8x4xf32>
      %54 = vector.broadcast %43 : vector<8x1xf32> to vector<8x4xf32>
      %55 = arith.mulf %54, %53 : vector<8x4xf32>
      %56 = arith.truncf %46 : vector<8x8xf32> to vector<8x8xbf16>
      %57 = arith.truncf %28 : vector<8x4xf32> to vector<8x4xbf16>
      %cst_35 = arith.constant dense<0.000000e+00> : vector<8x4xf32>
      %58 = tpu.matmul %56, %57, %cst_35 {dimension_numbers = #tpu.dot_dimension_numbers<[1], [0], [0], [1], [0, 0, 1, 1], [], []>} : vector<8x8xbf16>, vector<8x4xbf16>, vector<8x4xf32> -> vector<8x4xf32>
      %59 = arith.addf %55, %58 : vector<8x4xf32>
      %c0_36 = arith.constant 0 : index
      %c0_37 = arith.constant 0 : index
      %60 = vector.load %arg18[%c0_36, %c0_37] : memref<8x4xf32, #tpu.memory_space<vmem>>, vector<8x4xf32>
      tpu.vector_store %arg18[%c0_36, %c0_37], %59 {strides = array<i32>} : memref<8x4xf32, #tpu.memory_space<vmem>>, vector<8x4xf32>,
      %c0_38 = arith.constant 0 : index
      %c0_39 = arith.constant 0 : index
      %61 = vector.load %arg16[%c0_38, %c0_39] : memref<8x1xf32, #tpu.memory_space<vmem>>, vector<8x1xf32>
      tpu.vector_store %arg16[%c0_38, %c0_39], %41 {strides = array<i32>} : memref<8x1xf32, #tpu.memory_space<vmem>>, vector<8x1xf32>,
    } else {
    }
    %c0_i32_3 = arith.constant 0 : i32
    %10 = arith.cmpi eq, %arg2, %c0_i32_3 : i32
    %11 = arith.extui %10 : i1 to i32
    %c0_i32_4 = arith.constant 0 : i32
    %12 = arith.cmpi ne, %11, %c0_i32_4 : i32
    scf.if %12 {
      %c0 = arith.constant 0 : index
      %c0_5 = arith.constant 0 : index
      %13 = vector.load %arg18[%c0, %c0_5] : memref<8x4xf32, #tpu.memory_space<vmem>>, vector<8x4xf32>
      %c0_6 = arith.constant 0 : index
      %c0_7 = arith.constant 0 : index
      %14 = vector.load %arg17[%c0_6, %c0_7] : memref<8x1xf32, #tpu.memory_space<vmem>>, vector<8x1xf32>
      %15 = tpu.reciprocal %14 {approx = true} : vector<8x1xf32> -> vector<8x1xf32>
      %16 = vector.broadcast %15 : vector<8x1xf32> to vector<8x4xf32>
      %17 = arith.mulf %13, %16 : vector<8x4xf32>
      %c0_8 = arith.constant 0 : index
      %c0_9 = arith.constant 0 : index
      %c0_10 = arith.constant 0 : index
      %18 = vector.load %arg14[%c0_8, %c0_9, %c0_10] : memref<1x8x4xf32, #tpu.memory_space<vmem>>, vector<1x8x4xf32>
      %19 = vector.shape_cast %18 : vector<1x8x4xf32> to vector<8x4xf32>
      %20 = vector.shape_cast %17 : vector<8x4xf32> to vector<1x8x4xf32>
      tpu.vector_store %arg14[%c0_8, %c0_9, %c0_10], %20 {strides = array<i32>} : memref<1x8x4xf32, #tpu.memory_space<vmem>>, vector<1x8x4xf32>,
    } else {
    }
    return
  }
  func.func @transform_0(%arg0: i32, %arg1: i32, %arg2: i32, %arg3: memref<1xi32, #tpu.memory_space<smem>>) -> (i32, i32, i32) {
    %c0_i32 = arith.constant 0 : i32
    %c0_i32_0 = arith.constant 0 : i32
    return %arg0, %arg1, %c0_i32 : i32, i32, i32
  }
  func.func @transform_1(%arg0: i32, %arg1: i32, %arg2: i32, %arg3: memref<1xi32, #tpu.memory_space<smem>>) -> (i32, i32, i32) {
    %c0_i32 = arith.constant 0 : i32
    %c0_i32_0 = arith.constant 0 : i32
    return %arg0, %arg2, %c0_i32 : i32, i32, i32
  }
  func.func @transform_2(%arg0: i32, %arg1: i32, %arg2: i32, %arg3: memref<1xi32, #tpu.memory_space<smem>>) -> (i32, i32, i32) {
    %c0_i32 = arith.constant 0 : i32
    %c0_i32_0 = arith.constant 0 : i32
    return %arg0, %arg2, %c0_i32 : i32, i32, i32
  }
  func.func @transform_3(%arg0: i32, %arg1: i32, %arg2: i32, %arg3: memref<1xi32, #tpu.memory_space<smem>>) -> (i32, i32) {
    %c0_i32 = arith.constant 0 : i32
    %c0_i32_0 = arith.constant 0 : i32
    %c0_i32_1 = arith.constant 0 : i32
    return %c0_i32, %c0_i32_0 : i32, i32
  }
  func.func @transform_4(%arg0: i32, %arg1: i32, %arg2: i32, %arg3: memref<1xi32, #tpu.memory_space<smem>>) -> (i32, i32) {
    %c0_i32 = arith.constant 0 : i32
    %c0_i32_0 = arith.constant 0 : i32
    %c0_i32_1 = arith.constant 0 : i32
    return %c0_i32, %c0_i32_0 : i32, i32
  }
  func.func @transform_5(%arg0: i32, %arg1: i32, %arg2: i32, %arg3: memref<1xi32, #tpu.memory_space<smem>>) -> (i32, i32) {
    %c0_i32 = arith.constant 0 : i32
    %c0_i32_0 = arith.constant 0 : i32
    %c0_i32_1 = arith.constant 0 : i32
    return %c0_i32, %c0_i32_0 : i32, i32
  }
  func.func @transform_6(%arg0: i32, %arg1: i32, %arg2: i32, %arg3: memref<1xi32, #tpu.memory_space<smem>>) -> (i32, i32) {
    %c0_i32 = arith.constant 0 : i32
    %c0_i32_0 = arith.constant 0 : i32
    %c0_i32_1 = arith.constant 0 : i32
    return %c0_i32, %c0_i32_0 : i32, i32
  }
  func.func @transform_7(%arg0: i32, %arg1: i32, %arg2: i32, %arg3: memref<1xi32, #tpu.memory_space<smem>>) -> (i32, i32) {
    %c0_i32 = arith.constant 0 : i32
    %c0_i32_0 = arith.constant 0 : i32
    %c0_i32_1 = arith.constant 0 : i32
    return %c0_i32, %c0_i32_0 : i32, i32
  }
  func.func @transform_8(%arg0: i32, %arg1: i32, %arg2: i32, %arg3: memref<1xi32, #tpu.memory_space<smem>>) -> (i32, i32) {
    %c0_i32 = arith.constant 0 : i32
    %c0_i32_0 = arith.constant 0 : i32
    %c0_i32_1 = arith.constant 0 : i32
    return %c0_i32, %c0_i32_0 : i32, i32
  }
  func.func @transform_9(%arg0: i32, %arg1: i32, %arg2: i32, %arg3: memref<1xi32, #tpu.memory_space<smem>>) -> (i32, i32) {
    %c0_i32 = arith.constant 0 : i32
    return %arg1, %arg2 : i32, i32
  }
  func.func @transform_10(%arg0: i32, %arg1: i32, %arg2: i32, %arg3: memref<1xi32, #tpu.memory_space<smem>>) -> (i32, i32, i32) {
    %c0_i32 = arith.constant 0 : i32
    %c0_i32_0 = arith.constant 0 : i32
    return %arg0, %arg1, %c0_i32 : i32, i32, i32
  }
}

</mosaic_0001>

<llo_original>
// kernel: tpu_custom_call.1
$region0: #{tpu_custom_call.1}
  #allocation0 [shape = 'u32[]', space=smem, size = 0x4, offset = 0x4, fixed_abs, tag = 'smem constant byte address 0x4 - core index']
  #allocation1 [shape = 'u32[144,128]{1,0:T(1,128)}', space=vmem, size = 0x12000, scoped, tag = 'internal scratch']
  #allocation2 [shape = 'f32[8,4]{1,0:T(8,128)}', space=vmem, size = 0x1000, scoped, tag = 'scratch operand']
  #allocation3 [shape = 'f32[8,1]{1,0:T(8,128)}', space=vmem, size = 0x1000, scoped, tag = 'scratch operand']
  #allocation4 [shape = 'f32[8,1]{1,0:T(8,128)}', space=vmem, size = 0x1000, scoped, tag = 'scratch operand']
  #allocation5 [shape = 'f32[8,4]{1,0:T(8,128)}', space=vmem, size = 0x1000, scoped, tag = 'scratch operand']
  #allocation6 [shape = 's32[1]{0}', space=sflag, size = 0x4, scoped, tag = 'scoped memory for tpu_custom_call.1']
  #allocation7 [shape = 's32[1]{0:T(128)S(6)}', space=smem, size = 0x200, scoped, tag = 'prefetched SMEM operand 0']
  %s0 = inlined_call_operand.<no memory space> [shape: s32[1], index: 0, kind: input, shape index: {}]
  %s1 = inlined_call_operand.hbm [shape: f32[2,8,4], index: 1, kind: input, shape index: {}]
  %s2 = inlined_call_operand.hbm [shape: f32[2,8,4], index: 2, kind: input, shape index: {}]
  %s3 = inlined_call_operand.hbm [shape: f32[2,8,4], index: 3, kind: input, shape index: {}]
  %s4 = inlined_call_operand.hbm [shape: bf16[4,4], index: 4, kind: input, shape index: {}]
  %s5 = inlined_call_operand.hbm [shape: f32[1,4], index: 5, kind: input, shape index: {}]
  %s6 = inlined_call_operand.hbm [shape: bf16[4,4], index: 6, kind: input, shape index: {}]
  %s7 = inlined_call_operand.hbm [shape: f32[1,4], index: 7, kind: input, shape index: {}]
  %s8 = inlined_call_operand.hbm [shape: bf16[4,4], index: 8, kind: input, shape index: {}]
  %s9 = inlined_call_operand.hbm [shape: f32[1,4], index: 9, kind: input, shape index: {}]
  %s10 = inlined_call_operand.hbm [shape: s8[8,8], index: 10, kind: input, shape index: {}]
  %s11 = inlined_call_operand.hbm [shape: f32[2,8,4], index: 11, kind: output, shape index: {}]
  %s12 = sld [smem:[#allocation0]]
  $region125: #{tpu_custom_call.1} parent=0
    _
  %s14 = ssub.s32 1, %s12
  %s15 = scalar_select 0, %s14, %s12
  %16 = sst [smem:[#allocation7]] %s0
  $region1: #{tpu_custom_call.1} parent=0
    #allocation8 [shape = 'u8[8192]{0}', space=vmem, size = 0x2000, scoped, tag = 'input window, operand 1']
    #allocation9 [shape = 's32[2]{0}', space=sflag, size = 0x8, scoped, tag = 'scoped memory for tpu_custom_call.1']
    #allocation10 [shape = 's32[2]{0}', space=sflag, size = 0x8, scoped, tag = 'scoped memory for tpu_custom_call.1']
    #allocation11 [shape = 'u8[8192]{0}', space=vmem, size = 0x2000, scoped, tag = 'input window, operand 2']
    #allocation12 [shape = 's32[2]{0}', space=sflag, size = 0x8, scoped, tag = 'scoped memory for tpu_custom_call.1']
    #allocation13 [shape = 'u8[8192]{0}', space=vmem, size = 0x2000, scoped, tag = 'input window, operand 3']
    #allocation14 [shape = 'u8[1024]{0}', space=vmem, size = 0x400, scoped, tag = 'input window, operand 4, single buffered']
    #allocation15 [shape = 's32[1]{0}', space=sflag, size = 0x4, scoped, tag = 'scoped memory for tpu_custom_call.1']
    #allocation16 [shape = 'u8[512]{0}', space=vmem, size = 0x400, scoped, tag = 'input window, operand 5, single buffered']
    #allocation17 [shape = 'u8[1024]{0}', space=vmem, size = 0x400, scoped, tag = 'input window, operand 6, single buffered']
    #allocation18 [shape = 's32[1]{0}', space=sflag, size = 0x4, scoped, tag = 'scoped memory for tpu_custom_call.1']
    #allocation19 [shape = 'u8[512]{0}', space=vmem, size = 0x400, scoped, tag = 'input window, operand 7, single buffered']
    #allocation20 [shape = 'u8[1024]{0}', space=vmem, size = 0x400, scoped, tag = 'input window, operand 8, single buffered']
    #allocation21 [shape = 's32[1]{0}', space=sflag, size = 0x4, scoped, tag = 'scoped memory for tpu_custom_call.1']
    #allocation22 [shape = 'u8[512]{0}', space=vmem, size = 0x400, scoped, tag = 'input window, operand 9, single buffered']
    #allocation23 [shape = 'u8[1024]{0}', space=vmem, size = 0x400, scoped, tag = 'input window, operand 10, single buffered']
    #allocation24 [shape = 's32[1]{0}', space=sflag, size = 0x4, scoped, tag = 'scoped memory for tpu_custom_call.1']
    #allocation25 [shape = 'u8[8192]{0}', space=vmem, size = 0x2000, scoped, tag = 'output window, operand 0']
    %17 = vsyncpa [#allocation9], 0
    %s18 = scalar_lea.sflag [#allocation9], 1
    %19 = vsyncpa %s18, 0
    %20 = vsyncpa [#allocation12], 0
    %s21 = scalar_lea.sflag [#allocation12], 1
    %22 = vsyncpa %s21, 0
    %23 = vsyncpa [#allocation15], 0
    %24 = vsyncpa [#allocation18], 0
    %25 = vsyncpa [#allocation21], 0
    %26 = vsyncpa [#allocation24], 0
    %27 = vsyncpa [#allocation10], 0
    %s28 = scalar_lea.sflag [#allocation10], 1
    %29 = vsyncpa %s28, 0
    loop: start=0, step=1, limit=4
    $region2: #{tpu_custom_call.1} parent=1 // loop_pre_header
      _
    $region3: #{tpu_custom_call.1} parent=1 // loop_header
      %s31 = sphi 0, %s35
      %p32 = scmp.ge.s32.totalorder %s31, 4
      %s38 = sphi 0, %s57
      %s39 = sphi 0, %s53
      %s40 = sphi 0, %s49
      %s41 = sphi 0, %s38
      %s42 = sphi 0, %s39
      %s43 = sphi 0, %s40
      %s44 = sphi 0, %s41
      %s45 = sphi 0, %s42
      %s46 = sphi 0, %s43
      %s62 = sphi 0, %s64
      %s65 = sphi 0, %s62
      %s66 = sphi 0, %s65
      %s82 = sphi 0, %s66
      %s90 = sphi 0, %s92
      %s93 = sphi 0, %s90
      %s94 = sphi 0, %s93
      %s110 = sphi 0, %s94
      %s118 = sphi 0, %s120
      %s121 = sphi 0, %s118
      %s122 = sphi 0, %s121
      %s138 = sphi 0, %s122
      %s142 = sphi 0, %s142
      %s144 = sphi 0, %s142
      %s145 = sphi 0, %s144
      %s159 = sphi 0, %s145
      %s163 = sphi 0, %s163
      %s165 = sphi 0, %s163
      %s166 = sphi 0, %s165
      %s180 = sphi 0, %s166
      %s184 = sphi 0, %s184
      %s186 = sphi 0, %s184
      %s187 = sphi 0, %s186
      %s201 = sphi 0, %s187
      %s205 = sphi 0, %s205
      %s207 = sphi 0, %s205
      %s208 = sphi 0, %s207
      %s222 = sphi 0, %s208
      %s226 = sphi 0, %s226
      %s228 = sphi 0, %s226
      %s229 = sphi 0, %s228
      %s243 = sphi 0, %s229
      %s247 = sphi 0, %s247
      %s249 = sphi 0, %s247
      %s250 = sphi 0, %s249
      %s264 = sphi 0, %s250
      %s272 = sphi 0, %s274
      %s275 = sphi 0, %s272
      %s276 = sphi 0, %s275
      %s292 = sphi 0, %s276
      %s300 = sphi 0, %s302
      %s303 = sphi 0, %s300
      %s304 = sphi 0, %s303
      %s320 = sphi 0, %s304
    $region4: #{tpu_custom_call.1} parent=1 // loop_header_branch
      %34 = sbr.rel (%p32) target = $region8
    $region5: #{tpu_custom_call.1} parent=1 // loop_body
      %s36 = ssub.s32 %s31, 1
      %s37 = ssub.s32 %s31, 2
      %s47 = sadd.s32 1, %s40
      %p48 = scmp.ge.s32.totalorder %s47, 1
      %s49 = scalar_select %p48, 0, %s47
      %s50 = sadd.s32 1, %s39
      %s51 = scalar_select %p48, %s50, %s39
      %p52 = scmp.ge.s32.totalorder %s51, 1
      %s53 = scalar_select %p52, 0, %s51
      %s54 = sadd.s32 1, %s38
      %s55 = scalar_select %p52, %s54, %s38
      %p56 = scmp.ge.s32.totalorder %s55, 2
      %s57 = scalar_select %p56, 0, %s55
      %s58 = ssub.s32 %s38, %s57
      %s59 = ssub.s32 %s39, %s53
      %s60 = sor.u32 %s58, %s59
      %p61 = scmp.eq.s32.totalorder %s60, 0
      %s63 = sadd.s32 %s62, 1
      %s64 = scalar_select %p61, %s62, %s63
      %p67 = pneg %p61
      %p68 = scmp.eq.s32.totalorder %s31, 1
      %p69 = por %p67, %p68
      %p70 = scmp.ne.s32.totalorder %s62, %s65
      %p71 = scmp.eq.s32.totalorder %s31, 0
      %p72 = por %p70, %p71
      %p73 = scmp.ne.s32.totalorder %s62, %s65
      %p74 = scmp.eq.s32.totalorder %s36, 1
      %p75 = por %p73, %p74
      %p76 = scmp.ne.s32.totalorder %s65, %s66
      %p77 = scmp.eq.s32.totalorder %s36, 0
      %p78 = por %p76, %p77
      %p79 = scmp.ne.s32.totalorder %s65, %s66
      %p80 = scmp.eq.s32.totalorder %s37, 1
      %p81 = por %p79, %p80
      %p83 = scmp.ne.s32.totalorder %s66, %s82
      %p84 = scmp.eq.s32.totalorder %s37, 0
      %p85 = por %p83, %p84
      %s86 = ssub.s32 %s38, %s57
      %s87 = ssub.s32 %s40, %s49
      %s88 = sor.u32 %s86, %s87
      %p89 = scmp.eq.s32.totalorder %s88, 0
      %s91 = sadd.s32 %s90, 1
      %s92 = scalar_select %p89, %s90, %s91
      %p95 = pneg %p89
      %p96 = scmp.eq.s32.totalorder %s31, 1
      %p97 = por %p95, %p96
      %p98 = scmp.ne.s32.totalorder %s90, %s93
      %p99 = scmp.eq.s32.totalorder %s31, 0
      %p100 = por %p98, %p99
      %p101 = scmp.ne.s32.totalorder %s90, %s93
      %p102 = scmp.eq.s32.totalorder %s36, 1
      %p103 = por %p101, %p102
      %p104 = scmp.ne.s32.totalorder %s93, %s94
      %p105 = scmp.eq.s32.totalorder %s36, 0
      %p106 = por %p104, %p105
      %p107 = scmp.ne.s32.totalorder %s93, %s94
      %p108 = scmp.eq.s32.totalorder %s37, 1
      %p109 = por %p107, %p108
      %p111 = scmp.ne.s32.totalorder %s94, %s110
      %p112 = scmp.eq.s32.totalorder %s37, 0
      %p113 = por %p111, %p112
      %s114 = ssub.s32 %s38, %s57
      %s115 = ssub.s32 %s40, %s49
      %s116 = sor.u32 %s114, %s115
      %p117 = scmp.eq.s32.totalorder %s116, 0
      %s119 = sadd.s32 %s118, 1
      %s120 = scalar_select %p117, %s118, %s119
      %p123 = pneg %p117
      %p124 = scmp.eq.s32.totalorder %s31, 1
      %p125 = por %p123, %p124
      %p126 = scmp.ne.s32.totalorder %s118, %s121
      %p127 = scmp.eq.s32.totalorder %s31, 0
      %p128 = por %p126, %p127
      %p129 = scmp.ne.s32.totalorder %s118, %s121
      %p130 = scmp.eq.s32.totalorder %s36, 1
      %p131 = por %p129, %p130
      %p132 = scmp.ne.s32.totalorder %s121, %s122
      %p133 = scmp.eq.s32.totalorder %s36, 0
      %p134 = por %p132, %p133
      %p135 = scmp.ne.s32.totalorder %s121, %s122
      %p136 = scmp.eq.s32.totalorder %s37, 1
      %p137 = por %p135, %p136
      %p139 = scmp.ne.s32.totalorder %s122, %s138
      %p140 = scmp.eq.s32.totalorder %s37, 0
      %p141 = por %p139, %p140
      %s143 = sadd.s32 %s142, 1
      %p146 = scmp.eq.s32.totalorder %s31, 1
      %p147 = scmp.ne.s32.totalorder %s142, %s144
      %p148 = scmp.eq.s32.totalorder %s31, 0
      %p149 = por %p147, %p148
      %p150 = scmp.ne.s32.totalorder %s142, %s144
      %p151 = scmp.eq.s32.totalorder %s36, 1
      %p152 = por %p150, %p151
      %p153 = scmp.ne.s32.totalorder %s144, %s145
      %p154 = scmp.eq.s32.totalorder %s36, 0
      %p155 = por %p153, %p154
      %p156 = scmp.ne.s32.totalorder %s144, %s145
      %p157 = scmp.eq.s32.totalorder %s37, 1
      %p158 = por %p156, %p157
      %p160 = scmp.ne.s32.totalorder %s145, %s159
      %p161 = scmp.eq.s32.totalorder %s37, 0
      %p162 = por %p160, %p161
      %s164 = sadd.s32 %s163, 1
      %p167 = scmp.eq.s32.totalorder %s31, 1
      %p168 = scmp.ne.s32.totalorder %s163, %s165
      %p169 = scmp.eq.s32.totalorder %s31, 0
      %p170 = por %p168, %p169
      %p171 = scmp.ne.s32.totalorder %s163, %s165
      %p172 = scmp.eq.s32.totalorder %s36, 1
      %p173 = por %p171, %p172
      %p174 = scmp.ne.s32.totalorder %s165, %s166
      %p175 = scmp.eq.s32.totalorder %s36, 0
      %p176 = por %p174, %p175
      %p177 = scmp.ne.s32.totalorder %s165, %s166
      %p178 = scmp.eq.s32.totalorder %s37, 1
      %p179 = por %p177, %p178
      %p181 = scmp.ne.s32.totalorder %s166, %s180
      %p182 = scmp.eq.s32.totalorder %s37, 0
      %p183 = por %p181, %p182
      %s185 = sadd.s32 %s184, 1
      %p188 = scmp.eq.s32.totalorder %s31, 1
      %p189 = scmp.ne.s32.totalorder %s184, %s186
      %p190 = scmp.eq.s32.totalorder %s31, 0
      %p191 = por %p189, %p190
      %p192 = scmp.ne.s32.totalorder %s184, %s186
      %p193 = scmp.eq.s32.totalorder %s36, 1
      %p194 = por %p192, %p193
      %p195 = scmp.ne.s32.totalorder %s186, %s187
      %p196 = scmp.eq.s32.totalorder %s36, 0
      %p197 = por %p195, %p196
      %p198 = scmp.ne.s32.totalorder %s186, %s187
      %p199 = scmp.eq.s32.totalorder %s37, 1
      %p200 = por %p198, %p199
      %p202 = scmp.ne.s32.totalorder %s187, %s201
      %p203 = scmp.eq.s32.totalorder %s37, 0
      %p204 = por %p202, %p203
      %s206 = sadd.s32 %s205, 1
      %p209 = scmp.eq.s32.totalorder %s31, 1
      %p210 = scmp.ne.s32.totalorder %s205, %s207
      %p211 = scmp.eq.s32.totalorder %s31, 0
      %p212 = por %p210, %p211
      %p213 = scmp.ne.s32.totalorder %s205, %s207
      %p214 = scmp.eq.s32.totalorder %s36, 1
      %p215 = por %p213, %p214
      %p216 = scmp.ne.s32.totalorder %s207, %s208
      %p217 = scmp.eq.s32.totalorder %s36, 0
      %p218 = por %p216, %p217
      %p219 = scmp.ne.s32.totalorder %s207, %s208
      %p220 = scmp.eq.s32.totalorder %s37, 1
      %p221 = por %p219, %p220
      %p223 = scmp.ne.s32.totalorder %s208, %s222
      %p224 = scmp.eq.s32.totalorder %s37, 0
      %p225 = por %p223, %p224
      %s227 = sadd.s32 %s226, 1
      %p230 = scmp.eq.s32.totalorder %s31, 1
      %p231 = scmp.ne.s32.totalorder %s226, %s228
      %p232 = scmp.eq.s32.totalorder %s31, 0
      %p233 = por %p231, %p232
      %p234 = scmp.ne.s32.totalorder %s226, %s228
      %p235 = scmp.eq.s32.totalorder %s36, 1
      %p236 = por %p234, %p235
      %p237 = scmp.ne.s32.totalorder %s228, %s229
      %p238 = scmp.eq.s32.totalorder %s36, 0
      %p239 = por %p237, %p238
      %p240 = scmp.ne.s32.totalorder %s228, %s229
      %p241 = scmp.eq.s32.totalorder %s37, 1
      %p242 = por %p240, %p241
      %p244 = scmp.ne.s32.totalorder %s229, %s243
      %p245 = scmp.eq.s32.totalorder %s37, 0
      %p246 = por %p244, %p245
      %s248 = sadd.s32 %s247, 1
      %p251 = scmp.eq.s32.totalorder %s31, 1
      %p252 = scmp.ne.s32.totalorder %s247, %s249
      %p253 = scmp.eq.s32.totalorder %s31, 0
      %p254 = por %p252, %p253
      %p255 = scmp.ne.s32.totalorder %s247, %s249
      %p256 = scmp.eq.s32.totalorder %s36, 1
      %p257 = por %p255, %p256
      %p258 = scmp.ne.s32.totalorder %s249, %s250
      %p259 = scmp.eq.s32.totalorder %s36, 0
      %p260 = por %p258, %p259
      %p261 = scmp.ne.s32.totalorder %s249, %s250
      %p262 = scmp.eq.s32.totalorder %s37, 1
      %p263 = por %p261, %p262
      %p265 = scmp.ne.s32.totalorder %s250, %s264
      %p266 = scmp.eq.s32.totalorder %s37, 0
      %p267 = por %p265, %p266
      %s268 = ssub.s32 %s39, %s53
      %s269 = ssub.s32 %s40, %s49
      %s270 = sor.u32 %s268, %s269
      %p271 = scmp.eq.s32.totalorder %s270, 0
      %s273 = sadd.s32 %s272, 1
      %s274 = scalar_select %p271, %s272, %s273
      %p277 = pneg %p271
      %p278 = scmp.eq.s32.totalorder %s31, 1
      %p279 = por %p277, %p278
      %p280 = scmp.ne.s32.totalorder %s272, %s275
      %p281 = scmp.eq.s32.totalorder %s31, 0
      %p282 = por %p280, %p281
      %p283 = scmp.ne.s32.totalorder %s272, %s275
      %p284 = scmp.eq.s32.totalorder %s36, 1
      %p285 = por %p283, %p284
      %p286 = scmp.ne.s32.totalorder %s275, %s276
      %p287 = scmp.eq.s32.totalorder %s36, 0
      %p288 = por %p286, %p287
      %p289 = scmp.ne.s32.totalorder %s275, %s276
      %p290 = scmp.eq.s32.totalorder %s37, 1
      %p291 = por %p289, %p290
      %p293 = scmp.ne.s32.totalorder %s276, %s292
      %p294 = scmp.eq.s32.totalorder %s37, 0
      %p295 = por %p293, %p294
      %s296 = ssub.s32 %s38, %s57
      %s297 = ssub.s32 %s39, %s53
      %s298 = sor.u32 %s296, %s297
      %p299 = scmp.eq.s32.totalorder %s298, 0
      %s301 = sadd.s32 %s300, 1
      %s302 = scalar_select %p299, %s300, %s301
      %p305 = pneg %p299
      %p306 = scmp.eq.s32.totalorder %s31, 1
      %p307 = por %p305, %p306
      %p308 = scmp.ne.s32.totalorder %s300, %s303
      %p309 = scmp.eq.s32.totalorder %s31, 0
      %p310 = por %p308, %p309
      %p311 = scmp.ne.s32.totalorder %s300, %s303
      %p312 = scmp.eq.s32.totalorder %s36, 1
      %p313 = por %p311, %p312
      %p314 = scmp.ne.s32.totalorder %s303, %s304
      %p315 = scmp.eq.s32.totalorder %s36, 0
      %p316 = por %p314, %p315
      %p317 = scmp.ne.s32.totalorder %s303, %s304
      %p318 = scmp.eq.s32.totalorder %s37, 1
      %p319 = por %p317, %p318
      %p321 = scmp.ne.s32.totalorder %s304, %s320
      %p322 = scmp.eq.s32.totalorder %s37, 0
      %p323 = por %p321, %p322
      %p324 = scmp.le.s32.totalorder 1, %s31
      %p325 = scmp.lt.s32.totalorder %s31, 3
      %p326 = pnand %p324, %p325
      %p327 = pneg %p326
      // Predicated region
      $region9: #{tpu_custom_call.1} parent=5 // pred_check
        _
      $region10: #{tpu_custom_call.1} parent=5 // pred_check_branch
        %329 = sbr.rel (%p326) target = $region12
      $region11: #{tpu_custom_call.1} parent=5 // pred_region
        %s330 = ssub.s32 %s31, 1
        // Predicated region
        $region13: #{tpu_custom_call.1} parent=11 // pred_check
          %p331 = pneg %p155
        $region14: #{tpu_custom_call.1} parent=11 // pred_check_branch
          %333 = sbr.rel (%p331) target = $region16
        $region15: #{tpu_custom_call.1} parent=11 // pred_region
          %s335 = ssub.s32 32, 32
          %336 = vsyncadd [#allocation15], %s335
          %s338 = sshll.u32 [#allocation14], 4
          %s339 = int_to_ptr.vmem [resolvable:$true] %s338
          %341 = dma.hbm_to_vmem [thread:$0]  %s4, 32, %s339, [#allocation15]
        $region16: #{tpu_custom_call.1} parent=11 // pred_fallthru
          _
        // Predicated region
        $region17: #{tpu_custom_call.1} parent=11 // pred_check
          %p342 = pneg %p176
        $region18: #{tpu_custom_call.1} parent=11 // pred_check_branch
          %344 = sbr.rel (%p342) target = $region20
        $region19: #{tpu_custom_call.1} parent=11 // pred_region
          %s346 = ssub.s32 16, 16
          %347 = vsyncadd [#allocation15], %s346
          %s349 = sshll.u32 [#allocation16], 4
          %s350 = int_to_ptr.vmem [resolvable:$true] %s349
          %352 = dma.hbm_to_vmem [thread:$0]  %s5, 16, %s350, [#allocation15]
        $region20: #{tpu_custom_call.1} parent=11 // pred_fallthru
          _
        // Predicated region
        $region21: #{tpu_custom_call.1} parent=11 // pred_check
          %p353 = pneg %p197
        $region22: #{tpu_custom_call.1} parent=11 // pred_check_branch
          %355 = sbr.rel (%p353) target = $region24
        $region23: #{tpu_custom_call.1} parent=11 // pred_region
          %s357 = ssub.s32 32, 32
          %358 = vsyncadd [#allocation18], %s357
          %s360 = sshll.u32 [#allocation17], 4
          %s361 = int_to_ptr.vmem [resolvable:$true] %s360
          %363 = dma.hbm_to_vmem [thread:$0]  %s6, 32, %s361, [#allocation18]
        $region24: #{tpu_custom_call.1} parent=11 // pred_fallthru
          _
        // Predicated region
        $region25: #{tpu_custom_call.1} parent=11 // pred_check
          %p364 = pneg %p218
        $region26: #{tpu_custom_call.1} parent=11 // pred_check_branch
          %366 = sbr.rel (%p364) target = $region28
        $region27: #{tpu_custom_call.1} parent=11 // pred_region
          %s368 = ssub.s32 16, 16
          %369 = vsyncadd [#allocation18], %s368
          %s371 = sshll.u32 [#allocation19], 4
          %s372 = int_to_ptr.vmem [resolvable:$true] %s371
          %374 = dma.hbm_to_vmem [thread:$0]  %s7, 16, %s372, [#allocation18]
        $region28: #{tpu_custom_call.1} parent=11 // pred_fallthru
          _
        // Predicated region
        $region29: #{tpu_custom_call.1} parent=11 // pred_check
          %p375 = pneg %p239
        $region30: #{tpu_custom_call.1} parent=11 // pred_check_branch
          %377 = sbr.rel (%p375) target = $region32
        $region31: #{tpu_custom_call.1} parent=11 // pred_region
          %s379 = ssub.s32 32, 32
          %380 = vsyncadd [#allocation21], %s379
          %s382 = sshll.u32 [#allocation20], 4
          %s383 = int_to_ptr.vmem [resolvable:$true] %s382
          %385 = dma.hbm_to_vmem [thread:$0]  %s8, 32, %s383, [#allocation21]
        $region32: #{tpu_custom_call.1} parent=11 // pred_fallthru
          _
        // Predicated region
        $region33: #{tpu_custom_call.1} parent=11 // pred_check
          %p386 = pneg %p260
        $region34: #{tpu_custom_call.1} parent=11 // pred_check_branch
          %388 = sbr.rel (%p386) target = $region36
        $region35: #{tpu_custom_call.1} parent=11 // pred_region
          %s390 = ssub.s32 16, 16
          %391 = vsyncadd [#allocation21], %s390
          %s393 = sshll.u32 [#allocation22], 4
          %s394 = int_to_ptr.vmem [resolvable:$true] %s393
          %396 = dma.hbm_to_vmem [thread:$0]  %s9, 16, %s394, [#allocation21]
        $region36: #{tpu_custom_call.1} parent=11 // pred_fallthru
          _
        // Predicated region
        $region37: #{tpu_custom_call.1} parent=11 // pred_check
          %p397 = pneg %p288
        $region38: #{tpu_custom_call.1} parent=11 // pred_check_branch
          %399 = sbr.rel (%p397) target = $region40
        $region39: #{tpu_custom_call.1} parent=11 // pred_region
          %s401 = ssub.s32 32, 32
          %402 = vsyncadd [#allocation24], %s401
          %s403 = sadd.s32 %s43, %s42
          %s404 = smul.addr %s403, 32
          %s405 = scalar_lea.hbm %s10, %s404
          %s407 = sshll.u32 [#allocation23], 4
          %s408 = int_to_ptr.vmem [resolvable:$true] %s407
          %410 = dma.hbm_to_vmem [thread:$0]  %s405, 32, %s408, [#allocation24]
        $region40: #{tpu_custom_call.1} parent=11 // pred_fallthru
          _
      $region12: #{tpu_custom_call.1} parent=5 // pred_fallthru
        _
      %p411 = scmp.lt.s32.totalorder %s31, 2
      // Predicated region
      $region41: #{tpu_custom_call.1} parent=5 // pred_check
        %p412 = pneg %p411
      $region42: #{tpu_custom_call.1} parent=5 // pred_check_branch
        %414 = sbr.rel (%p412) target = $region44
      $region43: #{tpu_custom_call.1} parent=5 // pred_region
        // Predicated region
        $region45: #{tpu_custom_call.1} parent=43 // pred_check
          %p415 = pneg %p72
        $region46: #{tpu_custom_call.1} parent=43 // pred_check_branch
          %417 = sbr.rel (%p415) target = $region48
        $region47: #{tpu_custom_call.1} parent=43 // pred_region
          %s418 = sand.u32 %s62, 1
          %s419 = scalar_lea.sflag [#allocation9], %s418
          %s420 = sand.u32 %s62, 1
          %s421 = smul.addr %s420, 8
          %s422 = scalar_lea.vmem [#allocation8], %s421
          %s424 = ssub.s32 128, 128
          %425 = vsyncadd %s419, %s424
          %s426 = sadd.s32 %s39, %s38
          %s427 = smul.addr %s426, 128
          %s428 = scalar_lea.hbm %s1, %s427
          %s430 = sshll.u32 %s422, 4
          %s431 = int_to_ptr.vmem [resolvable:$true] %s430
          %433 = dma.hbm_to_vmem [thread:$0]  %s428, 128, %s431, %s419
        $region48: #{tpu_custom_call.1} parent=43 // pred_fallthru
          _
        // Predicated region
        $region49: #{tpu_custom_call.1} parent=43 // pred_check
          %p434 = pneg %p100
        $region50: #{tpu_custom_call.1} parent=43 // pred_check_branch
          %436 = sbr.rel (%p434) target = $region52
        $region51: #{tpu_custom_call.1} parent=43 // pred_region
          %s437 = sand.u32 %s31, 1
          %s438 = scalar_lea.sflag [#allocation12], %s437
          %s439 = sand.u32 %s90, 1
          %s440 = smul.addr %s439, 8
          %s441 = scalar_lea.vmem [#allocation11], %s440
          %s443 = ssub.s32 128, 128
          %444 = vsyncadd %s438, %s443
          %s445 = sadd.s32 %s40, %s38
          %s446 = smul.addr %s445, 128
          %s447 = scalar_lea.hbm %s2, %s446
          %s449 = sshll.u32 %s441, 4
          %s450 = int_to_ptr.vmem [resolvable:$true] %s449
          %452 = dma.hbm_to_vmem [thread:$0]  %s447, 128, %s450, %s438
        $region52: #{tpu_custom_call.1} parent=43 // pred_fallthru
          _
        // Predicated region
        $region53: #{tpu_custom_call.1} parent=43 // pred_check
          %p453 = pneg %p128
        $region54: #{tpu_custom_call.1} parent=43 // pred_check_branch
          %455 = sbr.rel (%p453) target = $region56
        $region55: #{tpu_custom_call.1} parent=43 // pred_region
          %s456 = sand.u32 %s31, 1
          %s457 = scalar_lea.sflag [#allocation12], %s456
          %s458 = sand.u32 %s118, 1
          %s459 = smul.addr %s458, 8
          %s460 = scalar_lea.vmem [#allocation13], %s459
          %s462 = ssub.s32 128, 128
          %463 = vsyncadd %s457, %s462
          %s464 = sadd.s32 %s40, %s38
          %s465 = smul.addr %s464, 128
          %s466 = scalar_lea.hbm %s3, %s465
          %s468 = sshll.u32 %s460, 4
          %s469 = int_to_ptr.vmem [resolvable:$true] %s468
          %471 = dma.hbm_to_vmem [thread:$0]  %s466, 128, %s469, %s457
        $region56: #{tpu_custom_call.1} parent=43 // pred_fallthru
          _
      $region44: #{tpu_custom_call.1} parent=5 // pred_fallthru
        _
      %p472 = scmp.le.s32.totalorder 1, %s31
      %p473 = scmp.lt.s32.totalorder %s31, 3
      %p474 = pnand %p472, %p473
      %p475 = pneg %p474
      // Predicated region
      $region57: #{tpu_custom_call.1} parent=5 // pred_check
        _
      $region58: #{tpu_custom_call.1} parent=5 // pred_check_branch
        %477 = sbr.rel (%p474) target = $region60
      $region59: #{tpu_custom_call.1} parent=5 // pred_region
        %s478 = ssub.s32 %s31, 1
        %s479 = sand.u32 %s65, 1
        %s480 = scalar_lea.sflag [#allocation9], %s479
        %s481 = sand.u32 %s65, 1
        %s482 = smul.addr %s481, 8
        %s483 = scalar_lea.vmem [#allocation8], %s482
        // Predicated region
        $region61: #{tpu_custom_call.1} parent=59 // pred_check
          %p484 = pneg %p78
        $region62: #{tpu_custom_call.1} parent=59 // pred_check_branch
          %486 = sbr.rel (%p484) target = $region64
        $region63: #{tpu_custom_call.1} parent=59 // pred_region
          %487 = dma.done %s480, 128
        $region64: #{tpu_custom_call.1} parent=59 // pred_fallthru
          _
        %s488 = sand.u32 %s36, 1
        %s489 = scalar_lea.sflag [#allocation12], %s488
        %s490 = sand.u32 %s93, 1
        %s491 = smul.addr %s490, 8
        %s492 = scalar_lea.vmem [#allocation11], %s491
        // Predicated region
        $region65: #{tpu_custom_call.1} parent=59 // pred_check
          %p493 = pneg %p106
        $region66: #{tpu_custom_call.1} parent=59 // pred_check_branch
          %495 = sbr.rel (%p493) target = $region68
        $region67: #{tpu_custom_call.1} parent=59 // pred_region
          %496 = dma.done %s489, 128
        $region68: #{tpu_custom_call.1} parent=59 // pred_fallthru
          _
        %s497 = sand.u32 %s36, 1
        %s498 = scalar_lea.sflag [#allocation12], %s497
        %s499 = sand.u32 %s121, 1
        %s500 = smul.addr %s499, 8
        %s501 = scalar_lea.vmem [#allocation13], %s500
        // Predicated region
        $region69: #{tpu_custom_call.1} parent=59 // pred_check
          %p502 = pneg %p134
        $region70: #{tpu_custom_call.1} parent=59 // pred_check_branch
          %504 = sbr.rel (%p502) target = $region72
        $region71: #{tpu_custom_call.1} parent=59 // pred_region
          %505 = dma.done %s498, 128
        $region72: #{tpu_custom_call.1} parent=59 // pred_fallthru
          _
        // Predicated region
        $region73: #{tpu_custom_call.1} parent=59 // pred_check
          %p506 = pneg %p155
        $region74: #{tpu_custom_call.1} parent=59 // pred_check_branch
          %508 = sbr.rel (%p506) target = $region76
        $region75: #{tpu_custom_call.1} parent=59 // pred_region
          %509 = dma.done [#allocation15], 32
        $region76: #{tpu_custom_call.1} parent=59 // pred_fallthru
          _
        // Predicated region
        $region77: #{tpu_custom_call.1} parent=59 // pred_check
          %p510 = pneg %p176
        $region78: #{tpu_custom_call.1} parent=59 // pred_check_branch
          %512 = sbr.rel (%p510) target = $region80
        $region79: #{tpu_custom_call.1} parent=59 // pred_region
          %513 = dma.done [#allocation15], 16
        $region80: #{tpu_custom_call.1} parent=59 // pred_fallthru
          _
        // Predicated region
        $region81: #{tpu_custom_call.1} parent=59 // pred_check
          %p514 = pneg %p197
        $region82: #{tpu_custom_call.1} parent=59 // pred_check_branch
          %516 = sbr.rel (%p514) target = $region84
        $region83: #{tpu_custom_call.1} parent=59 // pred_region
          %517 = dma.done [#allocation18], 32
        $region84: #{tpu_custom_call.1} parent=59 // pred_fallthru
          _
        // Predicated region
        $region85: #{tpu_custom_call.1} parent=59 // pred_check
          %p518 = pneg %p218
        $region86: #{tpu_custom_call.1} parent=59 // pred_check_branch
          %520 = sbr.rel (%p518) target = $region88
        $region87: #{tpu_custom_call.1} parent=59 // pred_region
          %521 = dma.done [#allocation18], 16
        $region88: #{tpu_custom_call.1} parent=59 // pred_fallthru
          _
        // Predicated region
        $region89: #{tpu_custom_call.1} parent=59 // pred_check
          %p522 = pneg %p239
        $region90: #{tpu_custom_call.1} parent=59 // pred_check_branch
          %524 = sbr.rel (%p522) target = $region92
        $region91: #{tpu_custom_call.1} parent=59 // pred_region
          %525 = dma.done [#allocation21], 32
        $region92: #{tpu_custom_call.1} parent=59 // pred_fallthru
          _
        // Predicated region
        $region93: #{tpu_custom_call.1} parent=59 // pred_check
          %p526 = pneg %p260
        $region94: #{tpu_custom_call.1} parent=59 // pred_check_branch
          %528 = sbr.rel (%p526) target = $region96
        $region95: #{tpu_custom_call.1} parent=59 // pred_region
          %529 = dma.done [#allocation21], 16
        $region96: #{tpu_custom_call.1} parent=59 // pred_fallthru
          _
        // Predicated region
        $region97: #{tpu_custom_call.1} parent=59 // pred_check
          %p530 = pneg %p288
        $region98: #{tpu_custom_call.1} parent=59 // pred_check_branch
          %532 = sbr.rel (%p530) target = $region100
        $region99: #{tpu_custom_call.1} parent=59 // pred_region
          %533 = dma.done [#allocation24], 32
        $region100: #{tpu_custom_call.1} parent=59 // pred_fallthru
          _
        %s534 = sand.u32 %s65, 1
        %s535 = scalar_lea.sflag [#allocation9], %s534
        %s536 = sand.u32 %s65, 1
        %s537 = smul.addr %s536, 8
        %s538 = scalar_lea.vmem [#allocation8], %s537
        %p539 = pneg %p78
        %p540 = pneg %p75
        %s541 = sand.u32 %s36, 1
        %s542 = scalar_lea.sflag [#allocation12], %s541
        %s543 = sand.u32 %s93, 1
        %s544 = smul.addr %s543, 8
        %s545 = scalar_lea.vmem [#allocation11], %s544
        %p546 = pneg %p106
        %p547 = pneg %p103
        %s548 = sand.u32 %s36, 1
        %s549 = scalar_lea.sflag [#allocation12], %s548
        %s550 = sand.u32 %s121, 1
        %s551 = smul.addr %s550, 8
        %s552 = scalar_lea.vmem [#allocation13], %s551
        %p553 = pneg %p134
        %p554 = pneg %p131
        %p555 = pneg %p155
        %p556 = pneg %p152
        %p557 = pneg %p176
        %p558 = pneg %p173
        %p559 = pneg %p197
        %p560 = pneg %p194
        %p561 = pneg %p218
        %p562 = pneg %p215
        %p563 = pneg %p239
        %p564 = pneg %p236
        %p565 = pneg %p260
        %p566 = pneg %p257
        %p567 = pneg %p288
        %p568 = pneg %p285
        %p569 = pneg %p316
        %p570 = pneg %p313
        %s571 = sand.u32 %s303, 1
        %s572 = scalar_lea.sflag [#allocation10], %s571
        %s573 = sand.u32 %s303, 1
        %s574 = smul.addr %s573, 8
        %s575 = scalar_lea.vmem [#allocation25], %s574
        %p579 = scmp.eq.s32.totalorder %s43, 0
        // Predicated region
        $region101: #{tpu_custom_call.1} parent=59 // pred_check
          %p580 = pneg %p579
        $region102: #{tpu_custom_call.1} parent=59 // pred_check_branch
          %582 = sbr.rel (%p580) target = $region104
        $region103: #{tpu_custom_call.1} parent=59 // pred_region
          %v583 = vld [vmem:[%s483] sm:$0xff]
          %v584 = vpack.c.bf16 %v583, %v583
          %v585 = vld [vmem:[#allocation14] sm:$0x3]
          %v586 = vld [vmem:[#allocation16] sm:$0x1]
          %v588 = vlaneseq
          %v589 = vshrl.u32 %v588, 7
          %v590 = vsub.s32 0, %v589
          %v591 = vrot.slane %v586, %v590
          %vm593 = vcmask 31744
          %v595 = vsel %vm593, %v584, 0
          %vm597 = vcmask 1041408
          %v599 = vsel %vm597, %v585, 0
          %601 = vmatprep.subr.bf16.mxu0 0
          %602 = vmatpush1.bf16.msra.mxu0 %v599
          %603 = vmatprep.subr.bf16.mxu0 0
          %604 = vmatpush1.bf16.msra.mxu0 0
          %605 = vmatprep.subr.bf16.mxu0 0
          %606 = vmatpush1.bf16.msra.mxu0 0
          %607 = vmatprep.subr.bf16.mxu0 0
          %608 = vmatpush1.bf16.msra.mxu0 0
          %609 = vmatprep.subr.bf16.mxu0 0
          %610 = vmatpush1.bf16.msra.mxu0 0
          %611 = vmatprep.subr.bf16.mxu0 0
          %612 = vmatpush1.bf16.msra.mxu0 0
          %613 = vmatprep.subr.bf16.mxu0 0
          %614 = vmatpush1.bf16.msra.mxu0 0
          %615 = vmatprep.subr.bf16.mxu0 0
          %616 = vmatpush1.bf16.msra.mxu0 0
          %617 = vmatprep.subr.bf16.mxu0 0
          %618 = vmatpush1.bf16.msra.mxu0 0
          %619 = vmatprep.subr.bf16.mxu0 0
          %620 = vmatpush1.bf16.msra.mxu0 0
          %621 = vmatprep.subr.bf16.mxu0 0
          %622 = vmatpush1.bf16.msra.mxu0 0
          %623 = vmatprep.subr.bf16.mxu0 0
          %624 = vmatpush1.bf16.msra.mxu0 0
          %625 = vmatprep.subr.bf16.mxu0 0
          %626 = vmatpush1.bf16.msra.mxu0 0
          %627 = vmatprep.subr.bf16.mxu0 0
          %628 = vmatpush1.bf16.msra.mxu0 0
          %629 = vmatprep.subr.bf16.mxu0 0
          %630 = vmatpush1.bf16.msra.mxu0 0
          %631 = vmatprep.subr.bf16.mxu0 0
          %632 = vmatpush1.bf16.msra.mxu0 0
          %633 = vmatprep.mubr.bf16.mxu0 0
          %634 = vmatmul.mubr.bf16.gmra.mrb[0].mxu0 %v595
          %v635 = vpop.f32.mrb[0].mxu0
          %v636 = vadd.f32 %v591, %v635
          %v637 = vpop.f32.mrb[0].mxu0
          %v638 = vpop.f32.mrb[0].mxu0
          %v639 = vpop.f32.mrb[0].mxu0
          %640 = vdwg.mxu0
          %v641 = vmul.f32 %v636, 0.5
          %642 = vst.msk [vmem:[#allocation2] sm:$0xff] %vm593, %v641
          %vm643 = vcmask 7168
          %644 = vst.msk [vmem:[#allocation3] sm:$0xff] %vm643, -inf
          %645 = vst.msk [vmem:[#allocation4] sm:$0xff] %vm643, 0.0
          %646 = vst.msk [vmem:[#allocation5] sm:$0xff] %vm593, 0.0
        $region104: #{tpu_custom_call.1} parent=59 // pred_fallthru
          _
        %s647 = sadd.s32 %s42, %s43
        %s648 = sld [smem:[#allocation7 + %s647]]
        %p649 = scmp.gt.s32.totalorder %s648, 0
        // Predicated region
        $region105: #{tpu_custom_call.1} parent=59 // pred_check
          %p650 = pneg %p649
        $region106: #{tpu_custom_call.1} parent=59 // pred_check_branch
          %652 = sbr.rel (%p650) target = $region108
        $region107: #{tpu_custom_call.1} parent=59 // pred_region
          %v653 = vld [vmem:[%s492] sm:$0xff]
          %v654 = vpack.c.bf16 %v653, %v653
          %v655 = vld [vmem:[#allocation17] sm:$0x3]
          %v656 = vld [vmem:[#allocation19] sm:$0x1]
          %v658 = vlaneseq
          %v659 = vshrl.u32 %v658, 7
          %v660 = vsub.s32 0, %v659
          %v661 = vrot.slane %v656, %v660
          %vm663 = vcmask 31744
          %v665 = vsel %vm663, %v654, 0
          %vm667 = vcmask 1041408
          %v669 = vsel %vm667, %v655, 0
          %671 = vmatprep.subr.bf16.mxu0 0
          %672 = vmatpush1.bf16.msra.mxu0 %v669
          %673 = vmatprep.subr.bf16.mxu0 0
          %674 = vmatpush1.bf16.msra.mxu0 0
          %675 = vmatprep.subr.bf16.mxu0 0
          %676 = vmatpush1.bf16.msra.mxu0 0
          %677 = vmatprep.subr.bf16.mxu0 0
          %678 = vmatpush1.bf16.msra.mxu0 0
          %679 = vmatprep.subr.bf16.mxu0 0
          %680 = vmatpush1.bf16.msra.mxu0 0
          %681 = vmatprep.subr.bf16.mxu0 0
          %682 = vmatpush1.bf16.msra.mxu0 0
          %683 = vmatprep.subr.bf16.mxu0 0
          %684 = vmatpush1.bf16.msra.mxu0 0
          %685 = vmatprep.subr.bf16.mxu0 0
          %686 = vmatpush1.bf16.msra.mxu0 0
          %687 = vmatprep.subr.bf16.mxu0 0
          %688 = vmatpush1.bf16.msra.mxu0 0
          %689 = vmatprep.subr.bf16.mxu0 0
          %690 = vmatpush1.bf16.msra.mxu0 0
          %691 = vmatprep.subr.bf16.mxu0 0
          %692 = vmatpush1.bf16.msra.mxu0 0
          %693 = vmatprep.subr.bf16.mxu0 0
          %694 = vmatpush1.bf16.msra.mxu0 0
          %695 = vmatprep.subr.bf16.mxu0 0
          %696 = vmatpush1.bf16.msra.mxu0 0
          %697 = vmatprep.subr.bf16.mxu0 0
          %698 = vmatpush1.bf16.msra.mxu0 0
          %699 = vmatprep.subr.bf16.mxu0 0
          %700 = vmatpush1.bf16.msra.mxu0 0
          %701 = vmatprep.subr.bf16.mxu0 0
          %702 = vmatpush1.bf16.msra.mxu0 0
          %703 = vmatprep.mubr.bf16.mxu0 0
          %704 = vmatmul.mubr.bf16.gmra.mrb[0].mxu0 %v665
          %v705 = vpop.f32.mrb[0].mxu0
          %v706 = vadd.f32 %v661, %v705
          %v707 = vpop.f32.mrb[0].mxu0
          %v708 = vpop.f32.mrb[0].mxu0
          %v709 = vpop.f32.mrb[0].mxu0
          %710 = vdwg.mxu0
          %v711 = vld [vmem:[%s501] sm:$0xff]
          %v712 = vpack.c.bf16 %v711, %v711
          %v713 = vld [vmem:[#allocation20] sm:$0x3]
          %v714 = vld [vmem:[#allocation22] sm:$0x1]
          %v716 = vlaneseq
          %v717 = vshrl.u32 %v716, 7
          %v718 = vsub.s32 0, %v717
          %v719 = vrot.slane %v714, %v718
          %v722 = vsel %vm663, %v712, 0
          %v725 = vsel %vm667, %v713, 0
          %727 = vmatprep.subr.bf16.mxu0 0
          %728 = vmatpush1.bf16.msra.mxu0 %v725
          %729 = vmatprep.subr.bf16.mxu0 0
          %730 = vmatpush1.bf16.msra.mxu0 0
          %731 = vmatprep.subr.bf16.mxu0 0
          %732 = vmatpush1.bf16.msra.mxu0 0
          %733 = vmatprep.subr.bf16.mxu0 0
          %734 = vmatpush1.bf16.msra.mxu0 0
          %735 = vmatprep.subr.bf16.mxu0 0
          %736 = vmatpush1.bf16.msra.mxu0 0
          %737 = vmatprep.subr.bf16.mxu0 0
          %738 = vmatpush1.bf16.msra.mxu0 0
          %739 = vmatprep.subr.bf16.mxu0 0
          %740 = vmatpush1.bf16.msra.mxu0 0
          %741 = vmatprep.subr.bf16.mxu0 0
          %742 = vmatpush1.bf16.msra.mxu0 0
          %743 = vmatprep.subr.bf16.mxu0 0
          %744 = vmatpush1.bf16.msra.mxu0 0
          %745 = vmatprep.subr.bf16.mxu0 0
          %746 = vmatpush1.bf16.msra.mxu0 0
          %747 = vmatprep.subr.bf16.mxu0 0
          %748 = vmatpush1.bf16.msra.mxu0 0
          %749 = vmatprep.subr.bf16.mxu0 0
          %750 = vmatpush1.bf16.msra.mxu0 0
          %751 = vmatprep.subr.bf16.mxu0 0
          %752 = vmatpush1.bf16.msra.mxu0 0
          %753 = vmatprep.subr.bf16.mxu0 0
          %754 = vmatpush1.bf16.msra.mxu0 0
          %755 = vmatprep.subr.bf16.mxu0 0
          %756 = vmatpush1.bf16.msra.mxu0 0
          %757 = vmatprep.subr.bf16.mxu0 0
          %758 = vmatpush1.bf16.msra.mxu0 0
          %759 = vmatprep.mubr.bf16.mxu0 0
          %760 = vmatmul.mubr.bf16.gmra.mrb[0].mxu0 %v722
          %v761 = vpop.f32.mrb[0].mxu0
          %v762 = vadd.f32 %v719, %v761
          %v763 = vpop.f32.mrb[0].mxu0
          %v764 = vpop.f32.mrb[0].mxu0
          %v765 = vpop.f32.mrb[0].mxu0
          %766 = vdwg.mxu0
          %v767 = vld [vmem:[#allocation2] sm:$0xff]
          %v768 = vpack.c.bf16 %v767, %v767
          %v769 = vpack.c.bf16 %v706, %v706
          %v771 = vsel %vm663, %v768, 0
          %v774 = vsel %vm663, %v769, 0
          %776 = vmatprep.subr.bf16.mxu0 0
          %777 = vmatpush1.bf16.xpose.msra.mxu0 %v774
          %778 = vmatprep.subr.bf16.mxu0 0
          %779 = vmatpush1.bf16.xpose.msra.mxu0 0
          %780 = vmatprep.subr.bf16.mxu0 0
          %781 = vmatpush1.bf16.xpose.msra.mxu0 0
          %782 = vmatprep.subr.bf16.mxu0 0
          %783 = vmatpush1.bf16.xpose.msra.mxu0 0
          %784 = vmatprep.subr.bf16.mxu0 0
          %785 = vmatpush1.bf16.xpose.msra.mxu0 0
          %786 = vmatprep.subr.bf16.mxu0 0
          %787 = vmatpush1.bf16.xpose.msra.mxu0 0
          %788 = vmatprep.subr.bf16.mxu0 0
          %789 = vmatpush1.bf16.xpose.msra.mxu0 0
          %790 = vmatprep.subr.bf16.mxu0 0
          %791 = vmatpush1.bf16.xpose.msra.mxu0 0
          %792 = vmatprep.subr.bf16.mxu0 0
          %793 = vmatpush1.bf16.xpose.msra.mxu0 0
          %794 = vmatprep.subr.bf16.mxu0 0
          %795 = vmatpush1.bf16.xpose.msra.mxu0 0
          %796 = vmatprep.subr.bf16.mxu0 0
          %797 = vmatpush1.bf16.xpose.msra.mxu0 0
          %798 = vmatprep.subr.bf16.mxu0 0
          %799 = vmatpush1.bf16.xpose.msra.mxu0 0
          %800 = vmatprep.subr.bf16.mxu0 0
          %801 = vmatpush1.bf16.xpose.msra.mxu0 0
          %802 = vmatprep.subr.bf16.mxu0 0
          %803 = vmatpush1.bf16.xpose.msra.mxu0 0
          %804 = vmatprep.subr.bf16.mxu0 0
          %805 = vmatpush1.bf16.xpose.msra.mxu0 0
          %806 = vmatprep.subr.bf16.mxu0 0
          %807 = vmatpush1.bf16.xpose.msra.mxu0 0
          %808 = vmatprep.mubr.bf16.mxu0 0
          %809 = vmatmul.mubr.bf16.gmra.mrb[0].mxu0 %v771
          %v810 = vpop.f32.mrb[0].mxu0
          %v811 = vadd.f32 0.0, %v810
          %v812 = vpop.f32.mrb[0].mxu0
          %v813 = vpop.f32.mrb[0].mxu0
          %v814 = vpop.f32.mrb[0].mxu0
          %815 = vdwg.mxu0
          %v816 = vld [vmem:[#allocation23] sm:$0x3]
          %vm817 = vnez %v816
          %v818 = vsel %vm817, 16843009, 0
          %v819 = vunpack.c.0.s8 %v818
          %vm820 = vcmp.ne.s32.totalorder %v819, 0
          %v821 = vsel %vm820, -1e+09, %v811
          %v822 = vld [vmem:[#allocation3] sm:$0xff]
          %vm823 = vcmask 64512
          %v824 = vsel %vm823, %v821, -inf
          %825 = vmax.xlane.f32.xlu0 %v824
          %v826 = vpop.xlane.xlu0 %825
          %v827 = vmax.f32 %v822, %v826
          %v828 = vsub.f32 %v822, %v827
          %v829 = vmul.f32 %v828, 1.442695
          %v830 = vpow.pop %v829
          %832 = vset.pattern.permute.xlu0 0
          %833 = vperm.xlu0 %832, %v827
          %v834 = vpop.permute.xlu0 %833
          %v836 = vsub.f32 %v821, %v834
          %v837 = vmul.f32 %v836, 1.442695
          %v838 = vpow.pop %v837
          %v839 = vld [vmem:[#allocation4] sm:$0xff]
          %v840 = vmul.f32 %v830, %v839
          %v841 = vsel %vm823, %v838, 0.0
          %842 = vadd.xlane.f32.xlu0 %v841
          %v843 = vpop.xlane.xlu0 %842
          %v844 = vadd.f32 %v840, %v843
          %vm845 = vcmask 7168
          %846 = vst.msk [vmem:[#allocation4] sm:$0xff] %vm845, %v844
          %v847 = vld [vmem:[#allocation5] sm:$0xff]
          %849 = vset.pattern.permute.xlu0 0
          %850 = vperm.xlu0 %849, %v830
          %v851 = vpop.permute.xlu0 %850
          %v853 = vmul.f32 %v851, %v847
          %v854 = vpack.c.bf16 %v838, %v838
          %v855 = vpack.c.bf16 %v762, %v762
          %v857 = vsel %vm823, %v854, 0
          %vm859 = vcmask 1043456
          %v861 = vsel %vm859, %v855, 0
          %863 = vmatprep.subr.bf16.mxu0 0
          %864 = vmatpush1.bf16.msra.mxu0 %v861
          %865 = vmatprep.subr.bf16.mxu0 0
          %866 = vmatpush1.bf16.msra.mxu0 0
          %867 = vmatprep.subr.bf16.mxu0 0
          %868 = vmatpush1.bf16.msra.mxu0 0
          %869 = vmatprep.subr.bf16.mxu0 0
          %870 = vmatpush1.bf16.msra.mxu0 0
          %871 = vmatprep.subr.bf16.mxu0 0
          %872 = vmatpush1.bf16.msra.mxu0 0
          %873 = vmatprep.subr.bf16.mxu0 0
          %874 = vmatpush1.bf16.msra.mxu0 0
          %875 = vmatprep.subr.bf16.mxu0 0
          %876 = vmatpush1.bf16.msra.mxu0 0
          %877 = vmatprep.subr.bf16.mxu0 0
          %878 = vmatpush1.bf16.msra.mxu0 0
          %879 = vmatprep.subr.bf16.mxu0 0
          %880 = vmatpush1.bf16.msra.mxu0 0
          %881 = vmatprep.subr.bf16.mxu0 0
          %882 = vmatpush1.bf16.msra.mxu0 0
          %883 = vmatprep.subr.bf16.mxu0 0
          %884 = vmatpush1.bf16.msra.mxu0 0
          %885 = vmatprep.subr.bf16.mxu0 0
          %886 = vmatpush1.bf16.msra.mxu0 0
          %887 = vmatprep.subr.bf16.mxu0 0
          %888 = vmatpush1.bf16.msra.mxu0 0
          %889 = vmatprep.subr.bf16.mxu0 0
          %890 = vmatpush1.bf16.msra.mxu0 0
          %891 = vmatprep.subr.bf16.mxu0 0
          %892 = vmatpush1.bf16.msra.mxu0 0
          %893 = vmatprep.subr.bf16.mxu0 0
          %894 = vmatpush1.bf16.msra.mxu0 0
          %895 = vmatprep.mubr.bf16.mxu0 0
          %896 = vmatmul.mubr.bf16.gmra.mrb[0].mxu0 %v857
          %v897 = vpop.f32.mrb[0].mxu0
          %v898 = vadd.f32 0.0, %v897
          %v899 = vpop.f32.mrb[0].mxu0
          %v900 = vpop.f32.mrb[0].mxu0
          %v901 = vpop.f32.mrb[0].mxu0
          %902 = vdwg.mxu0
          %v903 = vadd.f32 %v853, %v898
          %904 = vst.msk [vmem:[#allocation5] sm:$0xff] %vm663, %v903
          %905 = vst.msk [vmem:[#allocation3] sm:$0xff] %vm845, %v827
        $region108: #{tpu_custom_call.1} parent=59 // pred_fallthru
          _
        // Predicated region
        $region109: #{tpu_custom_call.1} parent=59 // pred_check
          %p906 = pneg %p579
        $region110: #{tpu_custom_call.1} parent=59 // pred_check_branch
          %908 = sbr.rel (%p906) target = $region112
        $region111: #{tpu_custom_call.1} parent=59 // pred_region
          %v909 = vld [vmem:[#allocation5] sm:$0xff]
          %v910 = vld [vmem:[#allocation4] sm:$0xff]
          %v911 = vrcp.pop %v910
          %913 = vset.pattern.permute.xlu0 0
          %914 = vperm.xlu0 %913, %v911
          %v915 = vpop.permute.xlu0 %914
          %v917 = vmul.f32 %v909, %v915
          %vm918 = vcmask 31744
          %919 = vst.msk [vmem:[%s575] sm:$0xff] %vm918, %v917
        $region112: #{tpu_custom_call.1} parent=59 // pred_fallthru
          _
        %s920 = sand.u32 %s303, 1
        %s921 = scalar_lea.sflag [#allocation10], %s920
        %s922 = sand.u32 %s303, 1
        %s923 = smul.addr %s922, 8
        %s924 = scalar_lea.vmem [#allocation25], %s923
        // Predicated region
        $region113: #{tpu_custom_call.1} parent=59 // pred_check
          %p925 = pneg %p313
        $region114: #{tpu_custom_call.1} parent=59 // pred_check_branch
          %927 = sbr.rel (%p925) target = $region116
        $region115: #{tpu_custom_call.1} parent=59 // pred_region
          %s929 = ssub.s32 128, 128
          %930 = vsyncadd %s921, %s929
          %s931 = sadd.s32 %s42, %s41
          %s932 = smul.addr %s931, 128
          %s933 = scalar_lea.hbm %s11, %s932
          %s935 = sshll.u32 %s924, 4
          %s936 = int_to_ptr.vmem [resolvable:$true] %s935
          %938 = dma.vmem_to_hbm [thread:$0]  %s936, 128, %s933, %s921
        $region116: #{tpu_custom_call.1} parent=59 // pred_fallthru
          _
      $region60: #{tpu_custom_call.1} parent=5 // pred_fallthru
        _
      %p939 = scmp.le.s32.totalorder 2, %s31
      // Predicated region
      $region117: #{tpu_custom_call.1} parent=5 // pred_check
        %p940 = pneg %p939
      $region118: #{tpu_custom_call.1} parent=5 // pred_check_branch
        %942 = sbr.rel (%p940) target = $region120
      $region119: #{tpu_custom_call.1} parent=5 // pred_region
        %s943 = ssub.s32 %s31, 2
        // Predicated region
        $region121: #{tpu_custom_call.1} parent=119 // pred_check
          %p944 = pneg %p319
        $region122: #{tpu_custom_call.1} parent=119 // pred_check_branch
          %946 = sbr.rel (%p944) target = $region124
        $region123: #{tpu_custom_call.1} parent=119 // pred_region
          %s947 = sand.u32 %s304, 1
          %s948 = scalar_lea.sflag [#allocation10], %s947
          %s949 = sand.u32 %s304, 1
          %s950 = smul.addr %s949, 8
          %s951 = scalar_lea.vmem [#allocation25], %s950
          %952 = dma.done %s948, 128
        $region124: #{tpu_custom_call.1} parent=119 // pred_fallthru
          _
      $region120: #{tpu_custom_call.1} parent=5 // pred_fallthru
        _
    $region6: #{tpu_custom_call.1} parent=1 // loop_footer
      %s35 = sadd.s32 1, %s31
    $region7: #{tpu_custom_call.1} parent=1 // loop_footer_branch
      %30 = sbr.rel target = $region3
    $region8: #{tpu_custom_call.1} parent=1 // loop_exit
      _
    %953 = vsyncpa [#allocation9], 1
    %s954 = scalar_lea.sflag [#allocation9], 1
    %955 = vsyncpa %s954, 1
    %956 = vsyncpa [#allocation12], 1
    %s957 = scalar_lea.sflag [#allocation12], 1
    %958 = vsyncpa %s957, 1
    %959 = vsyncpa [#allocation15], 1
    %960 = vsyncpa [#allocation18], 1
    %961 = vsyncpa [#allocation21], 1
    %962 = vsyncpa [#allocation24], 1
    %963 = vsyncpa [#allocation10], 1
    %s964 = scalar_lea.sflag [#allocation10], 1
    %965 = vsyncpa %s964, 1

</llo_original>
